<compile_context>
chip_gen: v5e
topology: v5e:2x2
jax: 0.10.0
libtpu: 0.0.40
codegen_flags: <defaults>
</compile_context>

<pallas_src>
import functools

import jax
import jax.numpy as jnp
import numpy as np
from jax.experimental import pallas as pl
from jax.experimental.pallas import tpu as pltpu


# --------------------------------- kernel ------------------------------------

def tfd_kernel(x_ref, f_ref, cm_ref, sb_ref, g1_ref, gb1_ref, g2_ref, wm_ref,
               o_ref, *, H):
    """NB images per grid step, stacked as an (M=NB*H, W*C) lane-dense slab."""
    f32, bf16 = jnp.float32, jnp.bfloat16
    x = x_ref[...]                            # (M, WC) f32
    fp = f_ref[...]                           # (M, FPAD) f32, zero padded
    M, WC = x.shape

    # Per-image boundary masks for the sublane rolls (rows stack NB images,
    # so wraps AND inter-image bleed are both killed at rows % H edges).
    row = jax.lax.broadcasted_iota(jnp.int32, (M, WC), 0)
    not_top = jnp.where(row % H == 0, 0.0, 1.0)
    not_bot = jnp.where(row % H == H - 1, 0.0, 1.0)

    def conv3x3(v, idx, bias_row):
        # dy taps: XLU sublane roll + VPU mask (exact zero padding at edges).
        # dx taps + channel mix + BN scale: one (3*WC, WC) bf16 banded matrix,
        # a single K=3*WC MXU matmul with f32 accumulation.
        vm = pltpu.roll(v, 1, 0) * not_top        # out[h] = v[h-1]
        vp = pltpu.roll(v, M - 1, 0) * not_bot    # out[h] = v[h+1]
        lhs = jnp.concatenate([vm, v, vp], axis=-1).astype(bf16)   # (M, 3*WC)
        out = jnp.dot(lhs, cm_ref[idx], preferred_element_type=f32)
        return out + bias_row

    # ---------------- res1 = BasicBlock1(x) -> (u1, delta_u0) ----------------
    t = jnp.maximum(conv3x3(x, 0, sb_ref[0:1, :]), 0.0)
    d0 = conv3x3(t, 1, sb_ref[1:2, :])
    u1 = jnp.maximum(d0 + x, 0.0)

    # ---------------- res2 = BasicBlock1(u1) -> (_, u2) -----------------------
    t2 = jnp.maximum(conv3x3(u1, 2, sb_ref[2:3, :]), 0.0)
    u2 = conv3x3(t2, 3, sb_ref[3:4, :])

    # ---------------- GatedSpatialConv2d(u2, f) -------------------------------
    # BN(concat(u2, f)) + 1x1 conv #1 folded into one block-diag matmul; f is
    # merged into the same K as u2 (lane-padded), output padded to GPAD lanes.
    gcat = jnp.concatenate([u2, fp], axis=-1).astype(bf16)        # (M, WC+FPAD)
    g = jnp.dot(gcat, g1_ref[...], preferred_element_type=f32) + gb1_ref[...]
    g = jnp.maximum(g, 0.0)                                       # (M, GPAD)
    # 1x1 conv #2 (C+1 -> 1) + final BN; output replicated across the C lanes.
    z = jnp.dot(g.astype(bf16), g2_ref[...], preferred_element_type=f32)
    z = z + sb_ref[4:5, :]
    alphas = pl.reciprocal(1.0 + jnp.exp(-z), approx=True)        # sigmoid (EUP)
    gated = (u2 * (alphas + 1.0)).astype(bf16)
    u3_pre = jnp.dot(gated, wm_ref[...], preferred_element_type=f32)

    o_ref[...] = 3.0 * d0 + u2 + u3_pre


# --------------------------------- wrapper ------------------------------------

def tfd_pallas(x_nhwc, f_nhwc, P):
    N, H, W, C = x_nhwc.shape
    WC, Cg = W * C, C + 1
    FPAD = pl.cdiv(W, 128) * 128             # f lane-padded width
    GPAD = pl.cdiv(W * Cg, 128) * 128        # gate hidden lane-padded width
    A = lambda v: np.asarray(v, np.float32)

    # ---- banded conv matrices: fuse W-shift + channel mix + BN scale ---------
    # Layout (3*WC, WC): rows [ky*WC + wi*C + ci] -> cols [wo*C + co].
    def band3(w3, scale):
        ws = A(w3) * A(scale)[None, None, None, :]      # scale output channels
        Mx = np.zeros((3, WC, WC), np.float32)
        for ky in range(3):
            for kx in range(3):
                for wo in range(W):
                    wi = wo + kx - 1
                    if 0 <= wi < W:
                        Mx[ky, wi * C:(wi + 1) * C, wo * C:(wo + 1) * C] = ws[ky, kx]
        return Mx.reshape(3 * WC, WC)

    conv_mats = np.stack([band3(P['w1a'], P['s1a']), band3(P['w1b'], P['s1b']),
                          band3(P['w2a'], P['s2a']), band3(P['w2b'], P['s2b'])])

    # ---- per-lane bias table (BN biases tiled per pixel) ----------------------
    sgn, bgn = float(A(P['sgn'])[0]), float(A(P['bgn'])[0])
    bg2 = float(A(P['bg2'])[0])
    sb = np.zeros((8, WC), np.float32)
    sb[0] = np.tile(A(P['b1a']), W)
    sb[1] = np.tile(A(P['b1b']), W)
    sb[2] = np.tile(A(P['b2a']), W)
    sb[3] = np.tile(A(P['b2b']), W)
    sb[4] = sgn * bg2 + bgn                   # constant added before sigmoid

    # ---- gate: BN(concat) + conv1x1 #1 folded; f merged into K; lane-padded ---
    sg0, bg0 = A(P['sg0']), A(P['bg0'])       # (C+1,)
    wg1, bg1 = A(P['wg1']), A(P['bg1'])       # (C+1, C+1), (C+1,)
    wg2 = A(P['wg2'])[:, 0]                   # (C+1,)
    gmat1 = np.zeros((WC + FPAD, GPAD), np.float32)   # rows 0:WC <- u2, WC: <- f
    gbias1 = np.zeros((1, GPAD), np.float32)
    gmat2 = np.zeros((GPAD, WC), np.float32)          # conv1x1 #2 + final BN scale
    for w in range(W):
        gmat1[w * C:(w + 1) * C, w * Cg:(w + 1) * Cg] = sg0[:C, None] * wg1[:C, :]
        gmat1[WC + w, w * Cg:(w + 1) * Cg] = sg0[C] * wg1[C, :]
        gmat2[w * Cg:(w + 1) * Cg, w * C:(w + 1) * C] = (sgn * wg2)[:, None]
    gbias1[0, :W * Cg] = np.tile(bg1 + bg0 @ wg1, W)

    # ---- main 1x1 conv (no bias), block-diagonal across pixels ----------------
    main_mat = np.zeros((WC, WC), np.float32)
    for w in range(W):
        main_mat[w * C:(w + 1) * C, w * C:(w + 1) * C] = A(P['wmain'])

    # ---- batch folding: NB images per grid step (M = NB*H matmul rows),
    #      but keep >= 2 grid steps so both v7x TensorCores get work. ----------
    NB = 1
    for cand in range(min(N, max(1, 128 // H)), 0, -1):
        if N % cand == 0:
            NB = cand
            break
    if N >= 2 and N // NB < 2:
        NB = next(c for c in range(N // 2, 0, -1) if N % c == 0)
    M = NB * H
    G = N // NB

    # ---- lane-dense inputs -----------------------------------------------------
    xd = x_nhwc.reshape(N * H, WC)                     # (N*H, 128)
    fd = f_nhwc.reshape(N * H, W)
    fp = jnp.pad(fd, ((0, 0), (0, FPAD - W)))          # (N*H, 128)

    bf = jnp.bfloat16
    weights = [jnp.asarray(conv_mats, bf), jnp.asarray(sb),
               jnp.asarray(gmat1, bf), jnp.asarray(gbias1),
               jnp.asarray(gmat2, bf), jnp.asarray(main_mat, bf)]
    args = [xd, fp] + weights

    img = lambda last: pl.BlockSpec((M, last), lambda b: (b, 0))
    full = lambda a: pl.BlockSpec(a.shape, lambda b, nd=a.ndim: (0,) * nd)
    in_specs = [img(WC), img(FPAD)] + [full(a) for a in weights]

    # ---- cost estimate: helps XLA overlap surrounding transposes --------------
    out_bytes = N * H * WC * 4
    bytes_accessed = out_bytes + sum(int(a.size) * a.dtype.itemsize for a in args)
    flops = 2 * N * H * (4 * 3 * WC * WC + (WC + FPAD) * GPAD + GPAD * WC + WC * WC)
    cost = pl.CostEstimate(flops=int(flops),
                           transcendentals=int(2 * N * H * WC),
                           bytes_accessed=int(bytes_accessed))

    out = pl.pallas_call(
        functools.partial(tfd_kernel, H=H),
        out_shape=jax.ShapeDtypeStruct((N * H, WC), jnp.float32),
        grid_spec=pltpu.PrefetchScalarGridSpec(
            num_scalar_prefetch=0,
            grid=(G,),
            in_specs=in_specs,
            out_specs=img(WC),
        ),
        compiler_params=pltpu.CompilerParams(
            dimension_semantics=("parallel",),
            vmem_limit_bytes=32 * 1024 * 1024,
        ),
        cost_estimate=cost,
    )(*args)
    return out.reshape(N, H, W, C)


# ----------------------------- parameter setup --------------------------------

def make_params(key, C):
    eps = 1e-5
    keys = iter(jax.random.split(key, 40))

    def conv_w(kh, kw, cin, cout):
        bound = 1.0 / np.sqrt(kh * kw * cin)
        return jax.random.uniform(next(keys), (kh, kw, cin, cout),
                                  jnp.float32, -bound, bound)

    def bn(c):
        gamma = jax.random.uniform(next(keys), (c,), jnp.float32, 0.5, 1.5)
        beta = 0.1 * jax.random.normal(next(keys), (c,), jnp.float32)
        mean = 0.1 * jax.random.normal(next(keys), (c,), jnp.float32)
        var = jax.random.uniform(next(keys), (c,), jnp.float32, 0.5, 1.5)
        scale = gamma / jnp.sqrt(var + eps)
        bias = beta - mean * scale
        return scale, bias

    def linear_w(cin, cout):
        bound = 1.0 / np.sqrt(cin)
        w = jax.random.uniform(next(keys), (cin, cout), jnp.float32, -bound, bound)
        b = jax.random.uniform(next(keys), (cout,), jnp.float32, -bound, bound)
        return w, b

    P = {}
    P['w1a'] = conv_w(3, 3, C, C); P['s1a'], P['b1a'] = bn(C)
    P['w1b'] = conv_w(3, 3, C, C); P['s1b'], P['b1b'] = bn(C)
    P['w2a'] = conv_w(3, 3, C, C); P['s2a'], P['b2a'] = bn(C)
    P['w2b'] = conv_w(3, 3, C, C); P['s2b'], P['b2b'] = bn(C)
    P['sg0'], P['bg0'] = bn(C + 1)
    P['wg1'], P['bg1'] = linear_w(C + 1, C + 1)
    P['wg2'], P['bg2'] = linear_w(C + 1, 1)
    P['sgn'], P['bgn'] = bn(1)
    bound = 1.0 / np.sqrt(C)
    P['wmain'] = jax.random.uniform(next(keys), (C, C), jnp.float32, -bound, bound)
    return P


# ------------------------------ pure-JAX reference -----------------------------

def tfd_reference(x, f, P):
    hp = jax.lax.Precision.HIGHEST
    conv = lambda a, w: jax.lax.conv_general_dilated(
        a, w, (1, 1), 'SAME',
        dimension_numbers=('NHWC', 'HWIO', 'NHWC'), precision=hp)
    bn = lambda a, s, b: a * s + b

    t = jax.nn.relu(bn(conv(x, P['w1a']), P['s1a'], P['b1a']))
    d0 = bn(conv(t, P['w1b']), P['s1b'], P['b1b'])
    u1 = jax.nn.relu(d0 + x)
    t2 = jax.nn.relu(bn(conv(u1, P['w2a']), P['s2a'], P['b2a']))
    u2 = bn(conv(t2, P['w2b']), P['s2b'], P['b2b'])

    cat = jnp.concatenate([u2, f], axis=-1)
    g = bn(cat, P['sg0'], P['bg0'])
    g = jax.nn.relu(jnp.einsum('nhwc,cd->nhwd', g, P['wg1'], precision=hp) + P['bg1'])
    g2 = jnp.einsum('nhwc,cd->nhwd', g, P['wg2'], precision=hp) + P['bg2']
    alphas = jax.nn.sigmoid(bn(g2, P['sgn'], P['bgn']))
    u3_pre = jnp.einsum('nhwc,cd->nhwd', u2 * (alphas + 1.0), P['wmain'], precision=hp)
    return 3.0 * d0 + u2 + u3_pre


# ----------------------------------- main --------------------------------------

if __name__ == "__main__":
    N, C, H, W = 2, 8, 16, 16          # inch == outch (required by residual add)
    key = jax.random.PRNGKey(0)
    kx, kf, kp = jax.random.split(key, 3)

    # PyTorch-style NCHW inputs
    x_nchw = jax.random.normal(kx, (N, C, H, W), jnp.float32)
    f_nchw = jax.random.normal(kf, (N, 1, H, W), jnp.float32)
    P = make_params(kp, C)

    # glue: NCHW -> NHWC (channels on the lane axis, then flattened with W)
    x_nhwc = jnp.transpose(x_nchw, (0, 2, 3, 1))
    f_nhwc = jnp.transpose(f_nchw, (0, 2, 3, 1))

    out_nhwc = tfd_pallas(x_nhwc, f_nhwc, P)
    out_nchw = jnp.transpose(out_nhwc, (0, 3, 1, 2))   # back to PyTorch NCHW
    jax.block_until_ready(out_nchw)

    # correctness check vs pure-JAX reference (bf16 weights -> generous tol)
    ref_nhwc = tfd_reference(x_nhwc, f_nhwc, P)
    np.testing.assert_allclose(np.asarray(out_nhwc), np.asarray(ref_nhwc),
                               rtol=5e-2, atol=5e-2)

    print("KERNEL_OK")
</pallas_src>

<mosaic_0001>
module attributes {stable_mosaic.version = 11 : i64} {
  func.func @tfd_kernel(%arg0: i32, %arg1: memref<16x128xf32, #tpu.memory_space<vmem>>, %arg2: memref<16x128xf32, #tpu.memory_space<vmem>>, %arg3: memref<4x384x128xbf16, #tpu.memory_space<vmem>>, %arg4: memref<8x128xf32, #tpu.memory_space<vmem>>, %arg5: memref<256x256xbf16, #tpu.memory_space<vmem>>, %arg6: memref<1x256xf32, #tpu.memory_space<vmem>>, %arg7: memref<256x128xbf16, #tpu.memory_space<vmem>>, %arg8: memref<128x128xbf16, #tpu.memory_space<vmem>>, %arg9: memref<16x128xf32, #tpu.memory_space<vmem>>) attributes {dimension_semantics = [#tpu.dimension_semantics<parallel>], iteration_bounds = array<i64: 2>, scalar_prefetch = 0 : i64, scratch_operands = 0 : i64, tpu.core_type = #tpu.core_type<tc>, window_params = [{transform_indices = @transform_0, window_bounds = array<i64: 16, 128>}, {transform_indices = @transform_1, window_bounds = array<i64: 16, 128>}, {pipeline_mode = #tpu.pipeline_mode<synchronous>, transform_indices = @transform_2, window_bounds = array<i64: 4, 384, 128>}, {pipeline_mode = #tpu.pipeline_mode<synchronous>, transform_indices = @transform_3, window_bounds = array<i64: 8, 128>}, {pipeline_mode = #tpu.pipeline_mode<synchronous>, transform_indices = @transform_4, window_bounds = array<i64: 256, 256>}, {pipeline_mode = #tpu.pipeline_mode<synchronous>, transform_indices = @transform_5, window_bounds = array<i64: 1, 256>}, {pipeline_mode = #tpu.pipeline_mode<synchronous>, transform_indices = @transform_6, window_bounds = array<i64: 256, 128>}, {pipeline_mode = #tpu.pipeline_mode<synchronous>, transform_indices = @transform_7, window_bounds = array<i64: 128, 128>}, {transform_indices = @transform_8, window_bounds = array<i64: 16, 128>}]} {
    %c0 = arith.constant 0 : index
    %c0_0 = arith.constant 0 : index
    %0 = vector.load %arg1[%c0, %c0_0] : memref<16x128xf32, #tpu.memory_space<vmem>>, vector<16x128xf32>
    %c0_1 = arith.constant 0 : index
    %c0_2 = arith.constant 0 : index
    %1 = vector.load %arg2[%c0_1, %c0_2] : memref<16x128xf32, #tpu.memory_space<vmem>>, vector<16x128xf32>
    %2 = tpu.iota {dimensions = array<i32: 0>} : vector<16x128xi32>
    %c16_i32 = arith.constant 16 : i32
    %c0_i32 = arith.constant 0 : i32
    %3 = arith.cmpi eq, %c16_i32, %c0_i32 : i32
    %c1_i32 = arith.constant 1 : i32
    %4 = arith.select %3, %c1_i32, %c16_i32 : i32
    %5 = vector.broadcast %4 : i32 to vector<16x128xi32>
    %6 = arith.remsi %2, %5 : vector<16x128xi32>
    %c0_i32_3 = arith.constant 0 : i32
    %7 = vector.broadcast %c0_i32_3 : i32 to vector<16x128xi32>
    %8 = arith.cmpi ne, %6, %7 : vector<16x128xi32>
    %c0_i32_4 = arith.constant 0 : i32
    %9 = vector.broadcast %c0_i32_4 : i32 to vector<16x128xi32>
    %10 = arith.cmpi slt, %6, %9 : vector<16x128xi32>
    %c0_i32_5 = arith.constant 0 : i32
    %11 = arith.cmpi slt, %4, %c0_i32_5 : i32
    %12 = vector.broadcast %11 : i1 to vector<16x128xi1>
    %13 = vector.broadcast %12 : vector<16x128xi1> to vector<16x128xi1>
    %14 = arith.xori %10, %13 : vector<16x128xi1>
    %15 = arith.andi %14, %8 : vector<16x128xi1>
    %16 = vector.broadcast %4 : i32 to vector<16x128xi32>
    %17 = arith.addi %6, %16 : vector<16x128xi32>
    %18 = arith.select %15, %17, %6 : vector<16x128xi1>, vector<16x128xi32>
    %c0_i32_6 = arith.constant 0 : i32
    %19 = vector.broadcast %c0_i32_6 : i32 to vector<16x128xi32>
    %20 = arith.cmpi eq, %18, %19 : vector<16x128xi32>
    %cst = arith.constant 0.000000e+00 : f32
    %cst_7 = arith.constant 1.000000e+00 : f32
    %21 = vector.broadcast %cst : f32 to vector<16x128xf32>
    %22 = vector.broadcast %cst_7 : f32 to vector<16x128xf32>
    %23 = arith.select %20, %21, %22 : vector<16x128xi1>, vector<16x128xf32>
    %c16_i32_8 = arith.constant 16 : i32
    %c0_i32_9 = arith.constant 0 : i32
    %24 = arith.cmpi eq, %c16_i32_8, %c0_i32_9 : i32
    %c1_i32_10 = arith.constant 1 : i32
    %25 = arith.select %24, %c1_i32_10, %c16_i32_8 : i32
    %26 = vector.broadcast %25 : i32 to vector<16x128xi32>
    %27 = arith.remsi %2, %26 : vector<16x128xi32>
    %c0_i32_11 = arith.constant 0 : i32
    %28 = vector.broadcast %c0_i32_11 : i32 to vector<16x128xi32>
    %29 = arith.cmpi ne, %27, %28 : vector<16x128xi32>
    %c0_i32_12 = arith.constant 0 : i32
    %30 = vector.broadcast %c0_i32_12 : i32 to vector<16x128xi32>
    %31 = arith.cmpi slt, %27, %30 : vector<16x128xi32>
    %c0_i32_13 = arith.constant 0 : i32
    %32 = arith.cmpi slt, %25, %c0_i32_13 : i32
    %33 = vector.broadcast %32 : i1 to vector<16x128xi1>
    %34 = vector.broadcast %33 : vector<16x128xi1> to vector<16x128xi1>
    %35 = arith.xori %31, %34 : vector<16x128xi1>
    %36 = arith.andi %35, %29 : vector<16x128xi1>
    %37 = vector.broadcast %25 : i32 to vector<16x128xi32>
    %38 = arith.addi %27, %37 : vector<16x128xi32>
    %39 = arith.select %36, %38, %27 : vector<16x128xi1>, vector<16x128xi32>
    %c15_i32 = arith.constant 15 : i32
    %40 = vector.broadcast %c15_i32 : i32 to vector<16x128xi32>
    %41 = arith.cmpi eq, %39, %40 : vector<16x128xi32>
    %cst_14 = arith.constant 0.000000e+00 : f32
    %cst_15 = arith.constant 1.000000e+00 : f32
    %42 = vector.broadcast %cst_14 : f32 to vector<16x128xf32>
    %43 = vector.broadcast %cst_15 : f32 to vector<16x128xf32>
    %44 = arith.select %41, %42, %43 : vector<16x128xi1>, vector<16x128xf32>
    %c0_16 = arith.constant 0 : index
    %c0_17 = arith.constant 0 : index
    %45 = vector.load %arg4[%c0_16, %c0_17] : memref<8x128xf32, #tpu.memory_space<vmem>>, vector<1x128xf32>
    %c1_i32_18 = arith.constant 1 : i32
    %46 = tpu.dynamic_rotate %0 by %c1_i32_18 dim 0 : vector<16x128xf32>, i32 -> vector<16x128xf32>
    %47 = arith.mulf %46, %23 : vector<16x128xf32>
    %c15_i32_19 = arith.constant 15 : i32
    %48 = tpu.dynamic_rotate %0 by %c15_i32_19 dim 0 : vector<16x128xf32>, i32 -> vector<16x128xf32>
    %49 = arith.mulf %48, %44 : vector<16x128xf32>
    %50 = tpu.concatenate %47, %0, %49 in 1 : vector<16x128xf32>, vector<16x128xf32>, vector<16x128xf32> -> vector<16x384xf32>
    %51 = arith.truncf %50 : vector<16x384xf32> to vector<16x384xbf16>
    %c0_20 = arith.constant 0 : index
    %c0_21 = arith.constant 0 : index
    %c0_22 = arith.constant 0 : index
    %52 = vector.load %arg3[%c0_20, %c0_21, %c0_22] : memref<4x384x128xbf16, #tpu.memory_space<vmem>>, vector<1x384x128xbf16>
    %53 = vector.shape_cast %52 : vector<1x384x128xbf16> to vector<384x128xbf16>
    %cst_23 = arith.constant dense<0.000000e+00> : vector<16x128xf32>
    %54 = tpu.matmul %51, %53, %cst_23 {dimension_numbers = #tpu.dot_dimension_numbers<[1], [0], [0], [1], [0, 0, 1, 1], [], []>} : vector<16x384xbf16>, vector<384x128xbf16>, vector<16x128xf32> -> vector<16x128xf32>
    %55 = vector.broadcast %45 : vector<1x128xf32> to vector<16x128xf32>
    %56 = arith.addf %54, %55 : vector<16x128xf32>
    %cst_24 = arith.constant 0.000000e+00 : f32
    %57 = vector.broadcast %cst_24 : f32 to vector<16x128xf32>
    %58 = arith.maximumf %56, %57 : vector<16x128xf32>
    %c1 = arith.constant 1 : index
    %c0_25 = arith.constant 0 : index
    %59 = vector.load %arg4[%c1, %c0_25] : memref<8x128xf32, #tpu.memory_space<vmem>>, vector<1x128xf32>
    %c1_i32_26 = arith.constant 1 : i32
    %60 = tpu.dynamic_rotate %58 by %c1_i32_26 dim 0 : vector<16x128xf32>, i32 -> vector<16x128xf32>
    %61 = arith.mulf %60, %23 : vector<16x128xf32>
    %c15_i32_27 = arith.constant 15 : i32
    %62 = tpu.dynamic_rotate %58 by %c15_i32_27 dim 0 : vector<16x128xf32>, i32 -> vector<16x128xf32>
    %63 = arith.mulf %62, %44 : vector<16x128xf32>
    %64 = tpu.concatenate %61, %58, %63 in 1 : vector<16x128xf32>, vector<16x128xf32>, vector<16x128xf32> -> vector<16x384xf32>
    %65 = arith.truncf %64 : vector<16x384xf32> to vector<16x384xbf16>
    %c1_28 = arith.constant 1 : index
    %c0_29 = arith.constant 0 : index
    %c0_30 = arith.constant 0 : index
    %66 = vector.load %arg3[%c1_28, %c0_29, %c0_30] : memref<4x384x128xbf16, #tpu.memory_space<vmem>>, vector<1x384x128xbf16>
    %67 = vector.shape_cast %66 : vector<1x384x128xbf16> to vector<384x128xbf16>
    %cst_31 = arith.constant dense<0.000000e+00> : vector<16x128xf32>
    %68 = tpu.matmul %65, %67, %cst_31 {dimension_numbers = #tpu.dot_dimension_numbers<[1], [0], [0], [1], [0, 0, 1, 1], [], []>} : vector<16x384xbf16>, vector<384x128xbf16>, vector<16x128xf32> -> vector<16x128xf32>
    %69 = vector.broadcast %59 : vector<1x128xf32> to vector<16x128xf32>
    %70 = arith.addf %68, %69 : vector<16x128xf32>
    %71 = arith.addf %70, %0 : vector<16x128xf32>
    %cst_32 = arith.constant 0.000000e+00 : f32
    %72 = vector.broadcast %cst_32 : f32 to vector<16x128xf32>
    %73 = arith.maximumf %71, %72 : vector<16x128xf32>
    %c2 = arith.constant 2 : index
    %c0_33 = arith.constant 0 : index
    %74 = vector.load %arg4[%c2, %c0_33] : memref<8x128xf32, #tpu.memory_space<vmem>>, vector<1x128xf32>
    %c1_i32_34 = arith.constant 1 : i32
    %75 = tpu.dynamic_rotate %73 by %c1_i32_34 dim 0 : vector<16x128xf32>, i32 -> vector<16x128xf32>
    %76 = arith.mulf %75, %23 : vector<16x128xf32>
    %c15_i32_35 = arith.constant 15 : i32
    %77 = tpu.dynamic_rotate %73 by %c15_i32_35 dim 0 : vector<16x128xf32>, i32 -> vector<16x128xf32>
    %78 = arith.mulf %77, %44 : vector<16x128xf32>
    %79 = tpu.concatenate %76, %73, %78 in 1 : vector<16x128xf32>, vector<16x128xf32>, vector<16x128xf32> -> vector<16x384xf32>
    %80 = arith.truncf %79 : vector<16x384xf32> to vector<16x384xbf16>
    %c2_36 = arith.constant 2 : index
    %c0_37 = arith.constant 0 : index
    %c0_38 = arith.constant 0 : index
    %81 = vector.load %arg3[%c2_36, %c0_37, %c0_38] : memref<4x384x128xbf16, #tpu.memory_space<vmem>>, vector<1x384x128xbf16>
    %82 = vector.shape_cast %81 : vector<1x384x128xbf16> to vector<384x128xbf16>
    %cst_39 = arith.constant dense<0.000000e+00> : vector<16x128xf32>
    %83 = tpu.matmul %80, %82, %cst_39 {dimension_numbers = #tpu.dot_dimension_numbers<[1], [0], [0], [1], [0, 0, 1, 1], [], []>} : vector<16x384xbf16>, vector<384x128xbf16>, vector<16x128xf32> -> vector<16x128xf32>
    %84 = vector.broadcast %74 : vector<1x128xf32> to vector<16x128xf32>
    %85 = arith.addf %83, %84 : vector<16x128xf32>
    %cst_40 = arith.constant 0.000000e+00 : f32
    %86 = vector.broadcast %cst_40 : f32 to vector<16x128xf32>
    %87 = arith.maximumf %85, %86 : vector<16x128xf32>
    %c3 = arith.constant 3 : index
    %c0_41 = arith.constant 0 : index
    %88 = vector.load %arg4[%c3, %c0_41] : memref<8x128xf32, #tpu.memory_space<vmem>>, vector<1x128xf32>
    %c1_i32_42 = arith.constant 1 : i32
    %89 = tpu.dynamic_rotate %87 by %c1_i32_42 dim 0 : vector<16x128xf32>, i32 -> vector<16x128xf32>
    %90 = arith.mulf %89, %23 : vector<16x128xf32>
    %c15_i32_43 = arith.constant 15 : i32
    %91 = tpu.dynamic_rotate %87 by %c15_i32_43 dim 0 : vector<16x128xf32>, i32 -> vector<16x128xf32>
    %92 = arith.mulf %91, %44 : vector<16x128xf32>
    %93 = tpu.concatenate %90, %87, %92 in 1 : vector<16x128xf32>, vector<16x128xf32>, vector<16x128xf32> -> vector<16x384xf32>
    %94 = arith.truncf %93 : vector<16x384xf32> to vector<16x384xbf16>
    %c3_44 = arith.constant 3 : index
    %c0_45 = arith.constant 0 : index
    %c0_46 = arith.constant 0 : index
    %95 = vector.load %arg3[%c3_44, %c0_45, %c0_46] : memref<4x384x128xbf16, #tpu.memory_space<vmem>>, vector<1x384x128xbf16>
    %96 = vector.shape_cast %95 : vector<1x384x128xbf16> to vector<384x128xbf16>
    %cst_47 = arith.constant dense<0.000000e+00> : vector<16x128xf32>
    %97 = tpu.matmul %94, %96, %cst_47 {dimension_numbers = #tpu.dot_dimension_numbers<[1], [0], [0], [1], [0, 0, 1, 1], [], []>} : vector<16x384xbf16>, vector<384x128xbf16>, vector<16x128xf32> -> vector<16x128xf32>
    %98 = vector.broadcast %88 : vector<1x128xf32> to vector<16x128xf32>
    %99 = arith.addf %97, %98 : vector<16x128xf32>
    %100 = tpu.concatenate %99, %1 in 1 : vector<16x128xf32>, vector<16x128xf32> -> vector<16x256xf32>
    %101 = arith.truncf %100 : vector<16x256xf32> to vector<16x256xbf16>
    %c0_48 = arith.constant 0 : index
    %c0_49 = arith.constant 0 : index
    %102 = vector.load %arg5[%c0_48, %c0_49] : memref<256x256xbf16, #tpu.memory_space<vmem>>, vector<256x256xbf16>
    %cst_50 = arith.constant dense<0.000000e+00> : vector<16x256xf32>
    %103 = tpu.matmul %101, %102, %cst_50 {dimension_numbers = #tpu.dot_dimension_numbers<[1], [0], [0], [1], [0, 0, 1, 1], [], []>} : vector<16x256xbf16>, vector<256x256xbf16>, vector<16x256xf32> -> vector<16x256xf32>
    %c0_51 = arith.constant 0 : index
    %c0_52 = arith.constant 0 : index
    %104 = vector.load %arg6[%c0_51, %c0_52] : memref<1x256xf32, #tpu.memory_space<vmem>>, vector<1x256xf32>
    %105 = vector.broadcast %104 : vector<1x256xf32> to vector<16x256xf32>
    %106 = arith.addf %103, %105 : vector<16x256xf32>
    %cst_53 = arith.constant 0.000000e+00 : f32
    %107 = vector.broadcast %cst_53 : f32 to vector<16x256xf32>
    %108 = arith.maximumf %106, %107 : vector<16x256xf32>
    %109 = arith.truncf %108 : vector<16x256xf32> to vector<16x256xbf16>
    %c0_54 = arith.constant 0 : index
    %c0_55 = arith.constant 0 : index
    %110 = vector.load %arg7[%c0_54, %c0_55] : memref<256x128xbf16, #tpu.memory_space<vmem>>, vector<256x128xbf16>
    %cst_56 = arith.constant dense<0.000000e+00> : vector<16x128xf32>
    %111 = tpu.matmul %109, %110, %cst_56 {dimension_numbers = #tpu.dot_dimension_numbers<[1], [0], [0], [1], [0, 0, 1, 1], [], []>} : vector<16x256xbf16>, vector<256x128xbf16>, vector<16x128xf32> -> vector<16x128xf32>
    %c4 = arith.constant 4 : index
    %c0_57 = arith.constant 0 : index
    %112 = vector.load %arg4[%c4, %c0_57] : memref<8x128xf32, #tpu.memory_space<vmem>>, vector<1x128xf32>
    %113 = vector.broadcast %112 : vector<1x128xf32> to vector<16x128xf32>
    %114 = arith.addf %111, %113 : vector<16x128xf32>
    %cst_58 = arith.constant 0.000000e+00 : f32
    %115 = vector.broadcast %cst_58 : f32 to vector<16x128xf32>
    %116 = arith.subf %115, %114 : vector<16x128xf32>
    %117 = math.exp %116 : vector<16x128xf32>
    %cst_59 = arith.constant 1.000000e+00 : f32
    %118 = vector.broadcast %cst_59 : f32 to vector<16x128xf32>
    %119 = arith.addf %118, %117 : vector<16x128xf32>
    %120 = tpu.reciprocal %119 {approx = true} : vector<16x128xf32> -> vector<16x128xf32>
    %cst_60 = arith.constant 1.000000e+00 : f32
    %121 = vector.broadcast %cst_60 : f32 to vector<16x128xf32>
    %122 = arith.addf %120, %121 : vector<16x128xf32>
    %123 = arith.mulf %99, %122 : vector<16x128xf32>
    %124 = arith.truncf %123 : vector<16x128xf32> to vector<16x128xbf16>
    %c0_61 = arith.constant 0 : index
    %c0_62 = arith.constant 0 : index
    %125 = vector.load %arg8[%c0_61, %c0_62] : memref<128x128xbf16, #tpu.memory_space<vmem>>, vector<128x128xbf16>
    %cst_63 = arith.constant dense<0.000000e+00> : vector<16x128xf32>
    %126 = tpu.matmul %124, %125, %cst_63 {dimension_numbers = #tpu.dot_dimension_numbers<[1], [0], [0], [1], [0, 0, 1, 1], [], []>} : vector<16x128xbf16>, vector<128x128xbf16>, vector<16x128xf32> -> vector<16x128xf32>
    %cst_64 = arith.constant 3.000000e+00 : f32
    %127 = vector.broadcast %cst_64 : f32 to vector<16x128xf32>
    %128 = arith.mulf %127, %70 : vector<16x128xf32>
    %129 = arith.addf %128, %99 : vector<16x128xf32>
    %130 = arith.addf %129, %126 : vector<16x128xf32>
    %c0_65 = arith.constant 0 : index
    %c0_66 = arith.constant 0 : index
    %131 = vector.load %arg9[%c0_65, %c0_66] : memref<16x128xf32, #tpu.memory_space<vmem>>, vector<16x128xf32>
    tpu.vector_store %arg9[%c0_65, %c0_66], %130 {strides = array<i32>} : memref<16x128xf32, #tpu.memory_space<vmem>>, vector<16x128xf32>,
    return
  }
  func.func @transform_0(%arg0: i32) -> (i32, i32) {
    %c0_i32 = arith.constant 0 : i32
    %c0_i32_0 = arith.constant 0 : i32
    return %arg0, %c0_i32 : i32, i32
  }
  func.func @transform_1(%arg0: i32) -> (i32, i32) {
    %c0_i32 = arith.constant 0 : i32
    %c0_i32_0 = arith.constant 0 : i32
    return %arg0, %c0_i32 : i32, i32
  }
  func.func @transform_2(%arg0: i32) -> (i32, i32, i32) {
    %c0_i32 = arith.constant 0 : i32
    %c0_i32_0 = arith.constant 0 : i32
    %c0_i32_1 = arith.constant 0 : i32
    %c0_i32_2 = arith.constant 0 : i32
    return %c0_i32, %c0_i32_0, %c0_i32_1 : i32, i32, i32
  }
  func.func @transform_3(%arg0: i32) -> (i32, i32) {
    %c0_i32 = arith.constant 0 : i32
    %c0_i32_0 = arith.constant 0 : i32
    %c0_i32_1 = arith.constant 0 : i32
    return %c0_i32, %c0_i32_0 : i32, i32
  }
  func.func @transform_4(%arg0: i32) -> (i32, i32) {
    %c0_i32 = arith.constant 0 : i32
    %c0_i32_0 = arith.constant 0 : i32
    %c0_i32_1 = arith.constant 0 : i32
    return %c0_i32, %c0_i32_0 : i32, i32
  }
  func.func @transform_5(%arg0: i32) -> (i32, i32) {
    %c0_i32 = arith.constant 0 : i32
    %c0_i32_0 = arith.constant 0 : i32
    %c0_i32_1 = arith.constant 0 : i32
    return %c0_i32, %c0_i32_0 : i32, i32
  }
  func.func @transform_6(%arg0: i32) -> (i32, i32) {
    %c0_i32 = arith.constant 0 : i32
    %c0_i32_0 = arith.constant 0 : i32
    %c0_i32_1 = arith.constant 0 : i32
    return %c0_i32, %c0_i32_0 : i32, i32
  }
  func.func @transform_7(%arg0: i32) -> (i32, i32) {
    %c0_i32 = arith.constant 0 : i32
    %c0_i32_0 = arith.constant 0 : i32
    %c0_i32_1 = arith.constant 0 : i32
    return %c0_i32, %c0_i32_0 : i32, i32
  }
  func.func @transform_8(%arg0: i32) -> (i32, i32) {
    %c0_i32 = arith.constant 0 : i32
    %c0_i32_0 = arith.constant 0 : i32
    return %arg0, %c0_i32 : i32, i32
  }
}

</mosaic_0001>

<llo_original>
// kernel: tpu_custom_call.1
$region0: #{tpu_custom_call.1}
  #allocation0 [shape = 'u32[]', space=smem, size = 0x4, offset = 0x4, fixed_abs, tag = 'smem constant byte address 0x4 - core index']
  #allocation1 [shape = 'u32[72,128]{1,0:T(1,128)}', space=vmem, size = 0x9000, scoped, tag = 'internal scratch']
  %s0 = inlined_call_operand.hbm [shape: f32[32,128], index: 0, kind: input, shape index: {}]
  %s1 = inlined_call_operand.hbm [shape: f32[32,128], index: 1, kind: input, shape index: {}]
  %s2 = inlined_call_operand.hbm [shape: bf16[4,384,128], index: 2, kind: input, shape index: {}]
  %s3 = inlined_call_operand.hbm [shape: f32[8,128], index: 3, kind: input, shape index: {}]
  %s4 = inlined_call_operand.hbm [shape: bf16[256,256], index: 4, kind: input, shape index: {}]
  %s5 = inlined_call_operand.vmem [shape: f32[1,256], index: 5, kind: input, shape index: {}]
  %s6 = inlined_call_operand.hbm [shape: bf16[256,128], index: 6, kind: input, shape index: {}]
  %s7 = inlined_call_operand.hbm [shape: bf16[128,128], index: 7, kind: input, shape index: {}]
  %s8 = inlined_call_operand.hbm [shape: f32[32,128], index: 8, kind: output, shape index: {}]
  %s9 = sld [smem:[#allocation0]]
  $region93: #{tpu_custom_call.1} parent=0
    _
  %s11 = ssub.s32 1, %s9
  %s12 = scalar_select 0, %s11, %s9
  $region1: #{tpu_custom_call.1} parent=0
    #allocation2 [shape = 'u8[16384]{0}', space=vmem, size = 0x4000, scoped, tag = 'input window, operand 0']
    #allocation3 [shape = 's32[2]{0}', space=sflag, size = 0x8, scoped, tag = 'scoped memory for tpu_custom_call.1']
    #allocation4 [shape = 's32[2]{0}', space=sflag, size = 0x8, scoped, tag = 'scoped memory for tpu_custom_call.1']
    #allocation5 [shape = 'u8[16384]{0}', space=vmem, size = 0x4000, scoped, tag = 'input window, operand 1']
    #allocation6 [shape = 's32[2]{0}', space=sflag, size = 0x8, scoped, tag = 'scoped memory for tpu_custom_call.1']
    #allocation7 [shape = 'u8[393216]{0}', space=vmem, size = 0x60000, scoped, tag = 'input window, operand 2, single buffered']
    #allocation8 [shape = 'u8[4096]{0}', space=vmem, size = 0x1000, scoped, tag = 'input window, operand 3, single buffered']
    #allocation9 [shape = 's32[1]{0}', space=sflag, size = 0x4, scoped, tag = 'scoped memory for tpu_custom_call.1']
    #allocation10 [shape = 'u8[131072]{0}', space=vmem, size = 0x20000, scoped, tag = 'input window, operand 4, single buffered']
    #allocation11 [shape = 'u8[65536]{0}', space=vmem, size = 0x10000, scoped, tag = 'input window, operand 6, single buffered']
    #allocation12 [shape = 's32[1]{0}', space=sflag, size = 0x4, scoped, tag = 'scoped memory for tpu_custom_call.1']
    #allocation13 [shape = 'u8[32768]{0}', space=vmem, size = 0x8000, scoped, tag = 'input window, operand 7, single buffered']
    #allocation14 [shape = 'u8[16384]{0}', space=vmem, size = 0x4000, scoped, tag = 'output window, operand 0']
    %13 = vsyncpa [#allocation3], 0
    %s14 = scalar_lea.sflag [#allocation3], 1
    %15 = vsyncpa %s14, 0
    %16 = vsyncpa [#allocation6], 0
    %s17 = scalar_lea.sflag [#allocation6], 1
    %18 = vsyncpa %s17, 0
    %19 = vsyncpa [#allocation9], 0
    %20 = vsyncpa [#allocation12], 0
    %21 = vsyncpa [#allocation4], 0
    %s22 = scalar_lea.sflag [#allocation4], 1
    %23 = vsyncpa %s22, 0
    loop: start=0, step=1, limit=4
    $region2: #{tpu_custom_call.1} parent=1 // loop_pre_header
      _
    $region3: #{tpu_custom_call.1} parent=1 // loop_header
      %s25 = sphi 0, %s29
      %p26 = scmp.ge.s32.totalorder %s25, 4
      %s35 = sphi 0, %s37
      %s38 = sphi 0, %s35
      %s39 = sphi 0, %s38
      %s55 = sphi 0, %s39
      %s61 = sphi 0, %s63
      %s64 = sphi 0, %s61
      %s65 = sphi 0, %s64
      %s81 = sphi 0, %s65
      %s85 = sphi 0, %s85
      %s87 = sphi 0, %s85
      %s88 = sphi 0, %s87
      %s102 = sphi 0, %s88
      %s106 = sphi 0, %s106
      %s108 = sphi 0, %s106
      %s109 = sphi 0, %s108
      %s123 = sphi 0, %s109
      %s127 = sphi 0, %s127
      %s129 = sphi 0, %s127
      %s130 = sphi 0, %s129
      %s144 = sphi 0, %s130
      %s148 = sphi 0, %s148
      %s150 = sphi 0, %s148
      %s151 = sphi 0, %s150
      %s165 = sphi 0, %s151
      %s169 = sphi 0, %s169
      %s171 = sphi 0, %s169
      %s172 = sphi 0, %s171
      %s186 = sphi 0, %s172
      %s190 = sphi 0, %s190
      %s192 = sphi 0, %s190
      %s193 = sphi 0, %s192
      %s207 = sphi 0, %s193
      %s213 = sphi 0, %s215
      %s216 = sphi 0, %s213
      %s217 = sphi 0, %s216
      %s233 = sphi 0, %s217
    $region4: #{tpu_custom_call.1} parent=1 // loop_header_branch
      %28 = sbr.rel (%p26) target = $region8
    $region5: #{tpu_custom_call.1} parent=1 // loop_body
      %s30 = ssub.s32 %s25, 1
      %s31 = ssub.s32 %s25, 2
      %s32 = sadd.s32 %s25, 1
      %s33 = ssub.s32 %s25, %s32
      %p34 = scmp.eq.s32.totalorder %s33, 0
      %s36 = sadd.s32 %s35, 1
      %s37 = scalar_select %p34, %s35, %s36
      %p40 = pneg %p34
      %p41 = scmp.eq.s32.totalorder %s25, 1
      %p42 = por %p40, %p41
      %p43 = scmp.ne.s32.totalorder %s35, %s38
      %p44 = scmp.eq.s32.totalorder %s25, 0
      %p45 = por %p43, %p44
      %p46 = scmp.ne.s32.totalorder %s35, %s38
      %p47 = scmp.eq.s32.totalorder %s30, 1
      %p48 = por %p46, %p47
      %p49 = scmp.ne.s32.totalorder %s38, %s39
      %p50 = scmp.eq.s32.totalorder %s30, 0
      %p51 = por %p49, %p50
      %p52 = scmp.ne.s32.totalorder %s38, %s39
      %p53 = scmp.eq.s32.totalorder %s31, 1
      %p54 = por %p52, %p53
      %p56 = scmp.ne.s32.totalorder %s39, %s55
      %p57 = scmp.eq.s32.totalorder %s31, 0
      %p58 = por %p56, %p57
      %s59 = ssub.s32 %s25, %s32
      %p60 = scmp.eq.s32.totalorder %s59, 0
      %s62 = sadd.s32 %s61, 1
      %s63 = scalar_select %p60, %s61, %s62
      %p66 = pneg %p60
      %p67 = scmp.eq.s32.totalorder %s25, 1
      %p68 = por %p66, %p67
      %p69 = scmp.ne.s32.totalorder %s61, %s64
      %p70 = scmp.eq.s32.totalorder %s25, 0
      %p71 = por %p69, %p70
      %p72 = scmp.ne.s32.totalorder %s61, %s64
      %p73 = scmp.eq.s32.totalorder %s30, 1
      %p74 = por %p72, %p73
      %p75 = scmp.ne.s32.totalorder %s64, %s65
      %p76 = scmp.eq.s32.totalorder %s30, 0
      %p77 = por %p75, %p76
      %p78 = scmp.ne.s32.totalorder %s64, %s65
      %p79 = scmp.eq.s32.totalorder %s31, 1
      %p80 = por %p78, %p79
      %p82 = scmp.ne.s32.totalorder %s65, %s81
      %p83 = scmp.eq.s32.totalorder %s31, 0
      %p84 = por %p82, %p83
      %s86 = sadd.s32 %s85, 1
      %p89 = scmp.eq.s32.totalorder %s25, 1
      %p90 = scmp.ne.s32.totalorder %s85, %s87
      %p91 = scmp.eq.s32.totalorder %s25, 0
      %p92 = por %p90, %p91
      %p93 = scmp.ne.s32.totalorder %s85, %s87
      %p94 = scmp.eq.s32.totalorder %s30, 1
      %p95 = por %p93, %p94
      %p96 = scmp.ne.s32.totalorder %s87, %s88
      %p97 = scmp.eq.s32.totalorder %s30, 0
      %p98 = por %p96, %p97
      %p99 = scmp.ne.s32.totalorder %s87, %s88
      %p100 = scmp.eq.s32.totalorder %s31, 1
      %p101 = por %p99, %p100
      %p103 = scmp.ne.s32.totalorder %s88, %s102
      %p104 = scmp.eq.s32.totalorder %s31, 0
      %p105 = por %p103, %p104
      %s107 = sadd.s32 %s106, 1
      %p110 = scmp.eq.s32.totalorder %s25, 1
      %p111 = scmp.ne.s32.totalorder %s106, %s108
      %p112 = scmp.eq.s32.totalorder %s25, 0
      %p113 = por %p111, %p112
      %p114 = scmp.ne.s32.totalorder %s106, %s108
      %p115 = scmp.eq.s32.totalorder %s30, 1
      %p116 = por %p114, %p115
      %p117 = scmp.ne.s32.totalorder %s108, %s109
      %p118 = scmp.eq.s32.totalorder %s30, 0
      %p119 = por %p117, %p118
      %p120 = scmp.ne.s32.totalorder %s108, %s109
      %p121 = scmp.eq.s32.totalorder %s31, 1
      %p122 = por %p120, %p121
      %p124 = scmp.ne.s32.totalorder %s109, %s123
      %p125 = scmp.eq.s32.totalorder %s31, 0
      %p126 = por %p124, %p125
      %s128 = sadd.s32 %s127, 1
      %p131 = scmp.eq.s32.totalorder %s25, 1
      %p132 = scmp.ne.s32.totalorder %s127, %s129
      %p133 = scmp.eq.s32.totalorder %s25, 0
      %p134 = por %p132, %p133
      %p135 = scmp.ne.s32.totalorder %s127, %s129
      %p136 = scmp.eq.s32.totalorder %s30, 1
      %p137 = por %p135, %p136
      %p138 = scmp.ne.s32.totalorder %s129, %s130
      %p139 = scmp.eq.s32.totalorder %s30, 0
      %p140 = por %p138, %p139
      %p141 = scmp.ne.s32.totalorder %s129, %s130
      %p142 = scmp.eq.s32.totalorder %s31, 1
      %p143 = por %p141, %p142
      %p145 = scmp.ne.s32.totalorder %s130, %s144
      %p146 = scmp.eq.s32.totalorder %s31, 0
      %p147 = por %p145, %p146
      %s149 = sadd.s32 %s148, 1
      %p152 = scmp.eq.s32.totalorder %s25, 1
      %p153 = scmp.ne.s32.totalorder %s148, %s150
      %p154 = scmp.eq.s32.totalorder %s25, 0
      %p155 = por %p153, %p154
      %p156 = scmp.ne.s32.totalorder %s148, %s150
      %p157 = scmp.eq.s32.totalorder %s30, 1
      %p158 = por %p156, %p157
      %p159 = scmp.ne.s32.totalorder %s150, %s151
      %p160 = scmp.eq.s32.totalorder %s30, 0
      %p161 = por %p159, %p160
      %p162 = scmp.ne.s32.totalorder %s150, %s151
      %p163 = scmp.eq.s32.totalorder %s31, 1
      %p164 = por %p162, %p163
      %p166 = scmp.ne.s32.totalorder %s151, %s165
      %p167 = scmp.eq.s32.totalorder %s31, 0
      %p168 = por %p166, %p167
      %s170 = sadd.s32 %s169, 1
      %p173 = scmp.eq.s32.totalorder %s25, 1
      %p174 = scmp.ne.s32.totalorder %s169, %s171
      %p175 = scmp.eq.s32.totalorder %s25, 0
      %p176 = por %p174, %p175
      %p177 = scmp.ne.s32.totalorder %s169, %s171
      %p178 = scmp.eq.s32.totalorder %s30, 1
      %p179 = por %p177, %p178
      %p180 = scmp.ne.s32.totalorder %s171, %s172
      %p181 = scmp.eq.s32.totalorder %s30, 0
      %p182 = por %p180, %p181
      %p183 = scmp.ne.s32.totalorder %s171, %s172
      %p184 = scmp.eq.s32.totalorder %s31, 1
      %p185 = por %p183, %p184
      %p187 = scmp.ne.s32.totalorder %s172, %s186
      %p188 = scmp.eq.s32.totalorder %s31, 0
      %p189 = por %p187, %p188
      %s191 = sadd.s32 %s190, 1
      %p194 = scmp.eq.s32.totalorder %s25, 1
      %p195 = scmp.ne.s32.totalorder %s190, %s192
      %p196 = scmp.eq.s32.totalorder %s25, 0
      %p197 = por %p195, %p196
      %p198 = scmp.ne.s32.totalorder %s190, %s192
      %p199 = scmp.eq.s32.totalorder %s30, 1
      %p200 = por %p198, %p199
      %p201 = scmp.ne.s32.totalorder %s192, %s193
      %p202 = scmp.eq.s32.totalorder %s30, 0
      %p203 = por %p201, %p202
      %p204 = scmp.ne.s32.totalorder %s192, %s193
      %p205 = scmp.eq.s32.totalorder %s31, 1
      %p206 = por %p204, %p205
      %p208 = scmp.ne.s32.totalorder %s193, %s207
      %p209 = scmp.eq.s32.totalorder %s31, 0
      %p210 = por %p208, %p209
      %s211 = ssub.s32 %s25, %s32
      %p212 = scmp.eq.s32.totalorder %s211, 0
      %s214 = sadd.s32 %s213, 1
      %s215 = scalar_select %p212, %s213, %s214
      %p218 = pneg %p212
      %p219 = scmp.eq.s32.totalorder %s25, 1
      %p220 = por %p218, %p219
      %p221 = scmp.ne.s32.totalorder %s213, %s216
      %p222 = scmp.eq.s32.totalorder %s25, 0
      %p223 = por %p221, %p222
      %p224 = scmp.ne.s32.totalorder %s213, %s216
      %p225 = scmp.eq.s32.totalorder %s30, 1
      %p226 = por %p224, %p225
      %p227 = scmp.ne.s32.totalorder %s216, %s217
      %p228 = scmp.eq.s32.totalorder %s30, 0
      %p229 = por %p227, %p228
      %p230 = scmp.ne.s32.totalorder %s216, %s217
      %p231 = scmp.eq.s32.totalorder %s31, 1
      %p232 = por %p230, %p231
      %p234 = scmp.ne.s32.totalorder %s217, %s233
      %p235 = scmp.eq.s32.totalorder %s31, 0
      %p236 = por %p234, %p235
      %p237 = scmp.le.s32.totalorder 1, %s25
      %p238 = scmp.lt.s32.totalorder %s25, 3
      %p239 = pnand %p237, %p238
      %p240 = pneg %p239
      // Predicated region
      $region9: #{tpu_custom_call.1} parent=5 // pred_check
        _
      $region10: #{tpu_custom_call.1} parent=5 // pred_check_branch
        %242 = sbr.rel (%p239) target = $region12
      $region11: #{tpu_custom_call.1} parent=5 // pred_region
        %s243 = ssub.s32 %s25, 1
        // Predicated region
        $region13: #{tpu_custom_call.1} parent=11 // pred_check
          %p244 = pneg %p98
        $region14: #{tpu_custom_call.1} parent=11 // pred_check_branch
          %246 = sbr.rel (%p244) target = $region16
        $region15: #{tpu_custom_call.1} parent=11 // pred_region
          %248 = vsyncadd [#allocation6], 0
          %s249 = sshll.u32 %s2, 4
          %s250 = int_to_ptr.hbm [resolvable:$true] %s249
          %s251 = sshll.u32 [#allocation7], 4
          %s252 = int_to_ptr.vmem [resolvable:$true] %s251
          %257 = dma.hbm_to_vmem [thread:$0]  %s250, 12288, %s252, [#allocation6], 64, 64, 4
        $region16: #{tpu_custom_call.1} parent=11 // pred_fallthru
          _
        // Predicated region
        $region17: #{tpu_custom_call.1} parent=11 // pred_check
          %p258 = pneg %p119
        $region18: #{tpu_custom_call.1} parent=11 // pred_check_branch
          %260 = sbr.rel (%p258) target = $region20
        $region19: #{tpu_custom_call.1} parent=11 // pred_region
          %262 = vsyncadd [#allocation9], 0
          %s264 = sshll.u32 %s3, 4
          %s265 = int_to_ptr.hbm [resolvable:$true] %s264
          %s266 = sshll.u32 [#allocation8], 4
          %s267 = int_to_ptr.vmem [resolvable:$true] %s266
          %269 = dma.hbm_to_vmem [thread:$0]  %s265, 128, %s267, [#allocation9]
        $region20: #{tpu_custom_call.1} parent=11 // pred_fallthru
          _
        // Predicated region
        $region21: #{tpu_custom_call.1} parent=11 // pred_check
          %p270 = pneg %p140
        $region22: #{tpu_custom_call.1} parent=11 // pred_check_branch
          %272 = sbr.rel (%p270) target = $region24
        $region23: #{tpu_custom_call.1} parent=11 // pred_region
          %274 = vsyncadd [#allocation9], 0
          %s275 = sshll.u32 %s4, 4
          %s276 = int_to_ptr.hbm [resolvable:$true] %s275
          %s277 = sshll.u32 [#allocation10], 4
          %s278 = int_to_ptr.vmem [resolvable:$true] %s277
          %283 = dma.hbm_to_vmem [thread:$0]  %s276, 4096, %s278, [#allocation9], 128, 128, 8
        $region24: #{tpu_custom_call.1} parent=11 // pred_fallthru
          _
        // Predicated region
        $region25: #{tpu_custom_call.1} parent=11 // pred_check
          %p284 = pneg %p161
        $region26: #{tpu_custom_call.1} parent=11 // pred_check_branch
          %286 = sbr.rel (%p284) target = $region28
        $region27: #{tpu_custom_call.1} parent=11 // pred_region
          _
        $region28: #{tpu_custom_call.1} parent=11 // pred_fallthru
          _
        // Predicated region
        $region29: #{tpu_custom_call.1} parent=11 // pred_check
          %p287 = pneg %p182
        $region30: #{tpu_custom_call.1} parent=11 // pred_check_branch
          %289 = sbr.rel (%p287) target = $region32
        $region31: #{tpu_custom_call.1} parent=11 // pred_region
          %291 = vsyncadd [#allocation12], 0
          %s292 = sshll.u32 %s6, 4
          %s293 = int_to_ptr.hbm [resolvable:$true] %s292
          %s294 = sshll.u32 [#allocation11], 4
          %s295 = int_to_ptr.vmem [resolvable:$true] %s294
          %300 = dma.hbm_to_vmem [thread:$0]  %s293, 2048, %s295, [#allocation12], 64, 64, 4
        $region32: #{tpu_custom_call.1} parent=11 // pred_fallthru
          _
        // Predicated region
        $region33: #{tpu_custom_call.1} parent=11 // pred_check
          %p301 = pneg %p203
        $region34: #{tpu_custom_call.1} parent=11 // pred_check_branch
          %303 = sbr.rel (%p301) target = $region36
        $region35: #{tpu_custom_call.1} parent=11 // pred_region
          %305 = vsyncadd [#allocation12], 0
          %s306 = sshll.u32 %s7, 4
          %s307 = int_to_ptr.hbm [resolvable:$true] %s306
          %s308 = sshll.u32 [#allocation13], 4
          %s309 = int_to_ptr.vmem [resolvable:$true] %s308
          %314 = dma.hbm_to_vmem [thread:$0]  %s307, 1024, %s309, [#allocation12], 64, 64, 4
        $region36: #{tpu_custom_call.1} parent=11 // pred_fallthru
          _
      $region12: #{tpu_custom_call.1} parent=5 // pred_fallthru
        _
      %p315 = scmp.lt.s32.totalorder %s25, 2
      // Predicated region
      $region37: #{tpu_custom_call.1} parent=5 // pred_check
        %p316 = pneg %p315
      $region38: #{tpu_custom_call.1} parent=5 // pred_check_branch
        %318 = sbr.rel (%p316) target = $region40
      $region39: #{tpu_custom_call.1} parent=5 // pred_region
        // Predicated region
        $region41: #{tpu_custom_call.1} parent=39 // pred_check
          %p319 = pneg %p45
        $region42: #{tpu_custom_call.1} parent=39 // pred_check_branch
          %321 = sbr.rel (%p319) target = $region44
        $region43: #{tpu_custom_call.1} parent=39 // pred_region
          %s322 = sand.u32 %s35, 1
          %s323 = scalar_lea.sflag [#allocation3], %s322
          %s324 = sand.u32 %s35, 1
          %s325 = smul.addr %s324, 16
          %s326 = scalar_lea.vmem [#allocation2], %s325
          %s327 = smul.u32 2, %s25
          %329 = vsyncadd %s323, 0
          %s330 = smul.addr %s327, 8
          %s331 = scalar_lea.hbm %s0, %s330
          %s332 = sshll.u32 %s331, 4
          %s333 = int_to_ptr.hbm [resolvable:$true] %s332
          %s334 = sshll.u32 %s326, 4
          %s335 = int_to_ptr.vmem [resolvable:$true] %s334
          %340 = dma.hbm_to_vmem [thread:$0]  %s333, 256, %s335, %s323, 128, 128, 8
        $region44: #{tpu_custom_call.1} parent=39 // pred_fallthru
          _
        // Predicated region
        $region45: #{tpu_custom_call.1} parent=39 // pred_check
          %p341 = pneg %p71
        $region46: #{tpu_custom_call.1} parent=39 // pred_check_branch
          %343 = sbr.rel (%p341) target = $region48
        $region47: #{tpu_custom_call.1} parent=39 // pred_region
          %s344 = sand.u32 %s25, 1
          %s345 = scalar_lea.sflag [#allocation6], %s344
          %s346 = sand.u32 %s61, 1
          %s347 = smul.addr %s346, 16
          %s348 = scalar_lea.vmem [#allocation5], %s347
          %s349 = smul.u32 2, %s25
          %351 = vsyncadd %s345, 0
          %s352 = smul.addr %s349, 8
          %s353 = scalar_lea.hbm %s1, %s352
          %s354 = sshll.u32 %s353, 4
          %s355 = int_to_ptr.hbm [resolvable:$true] %s354
          %s356 = sshll.u32 %s348, 4
          %s357 = int_to_ptr.vmem [resolvable:$true] %s356
          %362 = dma.hbm_to_vmem [thread:$0]  %s355, 256, %s357, %s345, 128, 128, 8
        $region48: #{tpu_custom_call.1} parent=39 // pred_fallthru
          _
      $region40: #{tpu_custom_call.1} parent=5 // pred_fallthru
        _
      %p363 = scmp.le.s32.totalorder 1, %s25
      %p364 = scmp.lt.s32.totalorder %s25, 3
      %p365 = pnand %p363, %p364
      %p366 = pneg %p365
      // Predicated region
      $region49: #{tpu_custom_call.1} parent=5 // pred_check
        _
      $region50: #{tpu_custom_call.1} parent=5 // pred_check_branch
        %368 = sbr.rel (%p365) target = $region52
      $region51: #{tpu_custom_call.1} parent=5 // pred_region
        %s369 = ssub.s32 %s25, 1
        %s370 = sand.u32 %s38, 1
        %s371 = scalar_lea.sflag [#allocation3], %s370
        %s372 = sand.u32 %s38, 1
        %s373 = smul.addr %s372, 16
        %s374 = scalar_lea.vmem [#allocation2], %s373
        // Predicated region
        $region53: #{tpu_custom_call.1} parent=51 // pred_check
          %p375 = pneg %p51
        $region54: #{tpu_custom_call.1} parent=51 // pred_check_branch
          %377 = sbr.rel (%p375) target = $region56
        $region55: #{tpu_custom_call.1} parent=51 // pred_region
          %379 = dma.done %s371, 256
        $region56: #{tpu_custom_call.1} parent=51 // pred_fallthru
          _
        %s380 = sand.u32 %s30, 1
        %s381 = scalar_lea.sflag [#allocation6], %s380
        %s382 = sand.u32 %s64, 1
        %s383 = smul.addr %s382, 16
        %s384 = scalar_lea.vmem [#allocation5], %s383
        // Predicated region
        $region57: #{tpu_custom_call.1} parent=51 // pred_check
          %p385 = pneg %p77
        $region58: #{tpu_custom_call.1} parent=51 // pred_check_branch
          %387 = sbr.rel (%p385) target = $region60
        $region59: #{tpu_custom_call.1} parent=51 // pred_region
          %389 = dma.done %s381, 256
        $region60: #{tpu_custom_call.1} parent=51 // pred_fallthru
          _
        // Predicated region
        $region61: #{tpu_custom_call.1} parent=51 // pred_check
          %p390 = pneg %p98
        $region62: #{tpu_custom_call.1} parent=51 // pred_check_branch
          %392 = sbr.rel (%p390) target = $region64
        $region63: #{tpu_custom_call.1} parent=51 // pred_region
          %394 = dma.done [#allocation6], 12288
        $region64: #{tpu_custom_call.1} parent=51 // pred_fallthru
          _
        // Predicated region
        $region65: #{tpu_custom_call.1} parent=51 // pred_check
          %p395 = pneg %p119
        $region66: #{tpu_custom_call.1} parent=51 // pred_check_branch
          %397 = sbr.rel (%p395) target = $region68
        $region67: #{tpu_custom_call.1} parent=51 // pred_region
          %399 = dma.done [#allocation9], 128
        $region68: #{tpu_custom_call.1} parent=51 // pred_fallthru
          _
        // Predicated region
        $region69: #{tpu_custom_call.1} parent=51 // pred_check
          %p400 = pneg %p140
        $region70: #{tpu_custom_call.1} parent=51 // pred_check_branch
          %402 = sbr.rel (%p400) target = $region72
        $region71: #{tpu_custom_call.1} parent=51 // pred_region
          %404 = dma.done [#allocation9], 4096
        $region72: #{tpu_custom_call.1} parent=51 // pred_fallthru
          _
        // Predicated region
        $region73: #{tpu_custom_call.1} parent=51 // pred_check
          %p405 = pneg %p182
        $region74: #{tpu_custom_call.1} parent=51 // pred_check_branch
          %407 = sbr.rel (%p405) target = $region76
        $region75: #{tpu_custom_call.1} parent=51 // pred_region
          %409 = dma.done [#allocation12], 2048
        $region76: #{tpu_custom_call.1} parent=51 // pred_fallthru
          _
        // Predicated region
        $region77: #{tpu_custom_call.1} parent=51 // pred_check
          %p410 = pneg %p203
        $region78: #{tpu_custom_call.1} parent=51 // pred_check_branch
          %412 = sbr.rel (%p410) target = $region80
        $region79: #{tpu_custom_call.1} parent=51 // pred_region
          %414 = dma.done [#allocation12], 1024
        $region80: #{tpu_custom_call.1} parent=51 // pred_fallthru
          _
        %s415 = sand.u32 %s38, 1
        %s416 = scalar_lea.sflag [#allocation3], %s415
        %s417 = sand.u32 %s38, 1
        %s418 = smul.addr %s417, 16
        %s419 = scalar_lea.vmem [#allocation2], %s418
        %p420 = pneg %p51
        %p421 = pneg %p48
        %s422 = sand.u32 %s30, 1
        %s423 = scalar_lea.sflag [#allocation6], %s422
        %s424 = sand.u32 %s64, 1
        %s425 = smul.addr %s424, 16
        %s426 = scalar_lea.vmem [#allocation5], %s425
        %p427 = pneg %p77
        %p428 = pneg %p74
        %p429 = pneg %p98
        %p430 = pneg %p95
        %p431 = pneg %p119
        %p432 = pneg %p116
        %p433 = pneg %p140
        %p434 = pneg %p137
        %p435 = pneg %p161
        %p436 = pneg %p158
        %p437 = pneg %p182
        %p438 = pneg %p179
        %p439 = pneg %p203
        %p440 = pneg %p200
        %p441 = pneg %p229
        %p442 = pneg %p226
        %s443 = sand.u32 %s216, 1
        %s444 = scalar_lea.sflag [#allocation4], %s443
        %s445 = sand.u32 %s216, 1
        %s446 = smul.addr %s445, 16
        %s447 = scalar_lea.vmem [#allocation14], %s446
        %s448 = smul.u32 2, %s30
        %s449 = smul.u32 2, %s30
        %s450 = smul.u32 2, %s30
        %v451 = vld [vmem:[%s374] sm:$0xff]
        %v452 = vld [vmem:[%s374 + $0x8] sm:$0xff]
        %v453 = vld [vmem:[%s384] sm:$0xff]
        %v454 = vld [vmem:[%s384 + $0x8] sm:$0xff]
        %v455 = vlaneseq
        %v456 = vshrl.u32 %v455, 7
        %v457 = vadd.s32 %v456, 8
        %vm458 = vcmp.lt.s32.totalorder %v456, 0
        %v459 = vsub.s32 0, %v456
        %v460 = vsel %vm458, %v459, %v456
        %v461 = vshrl.u32 %v460, 4
        %v462 = vand.u32 %v460, 15
        %v463 = vsub.s32 0, %v462
        %v464 = vsel %vm458, %v463, %v462
        %vm465 = vcmp.lt.s32.totalorder %v457, 0
        %v466 = vsub.s32 0, %v457
        %v467 = vsel %vm465, %v466, %v457
        %v468 = vshrl.u32 %v467, 4
        %v469 = vand.u32 %v467, 15
        %v470 = vsub.s32 0, %v469
        %v471 = vsel %vm465, %v470, %v469
        %vm472 = vcmp.ne.s32.totalorder %v464, 0
        %vm473 = vcmp.ne.s32.totalorder %v471, 0
        %vm474 = vcmp.lt.s32.totalorder %v464, 0
        %vm475 = vcmp.lt.s32.totalorder %v471, 0
        %vm476 = vmand %vm474, %vm472
        %vm477 = vmand %vm475, %vm473
        %v478 = vadd.s32 %v464, 16
        %v479 = vadd.s32 %v471, 16
        %v480 = vsel %vm476, %v478, %v464
        %v481 = vsel %vm477, %v479, %v471
        %vm482 = vcmp.eq.s32.totalorder %v480, 0
        %vm483 = vcmp.eq.s32.totalorder %v481, 0
        %v484 = vsel %vm482, 0.0, 1.0
        %v485 = vsel %vm483, 0.0, 1.0
        %vm486 = vcmp.eq.s32.totalorder %v480, 15
        %vm487 = vcmp.eq.s32.totalorder %v481, 15
        %v488 = vsel %vm486, 0.0, 1.0
        %v489 = vsel %vm487, 0.0, 1.0
        %v490 = vld [vmem:[#allocation8] sm:$0x1]
        %v491 = vrot.slane %v451, 7
        %v492 = vrot.slane %v452, 7
        %vm493 = vcmp.lt.s32.totalorder %v456, 1
        %v494 = vsel %vm493, %v491, %v492
        %v495 = vsel %vm493, %v492, %v491
        %v496 = vmul.f32 %v495, %v484
        %v497 = vmul.f32 %v494, %v485
        %v498 = vrot.slane %v451, 1
        %v499 = vrot.slane %v452, 1
        %vm500 = vcmp.lt.s32.totalorder %v456, 7
        %v501 = vsel %vm500, %v498, %v499
        %v502 = vsel %vm500, %v499, %v498
        %v503 = vmul.f32 %v501, %v488
        %v504 = vmul.f32 %v502, %v489
        %v505 = vpack.c.bf16 %v497, %v496
        %v506 = vpack.c.bf16 %v452, %v451
        %v507 = vpack.c.bf16 %v504, %v503
        %v508 = vld [vmem:[#allocation7] sm:$0xf]
        %v509 = vld [vmem:[#allocation7 + $0x4] sm:$0xf]
        %v510 = vld [vmem:[#allocation7 + $0x8] sm:$0xf]
        %v511 = vld [vmem:[#allocation7 + $0xc] sm:$0xf]
        %v512 = vld [vmem:[#allocation7 + $0x10] sm:$0xf]
        %v513 = vld [vmem:[#allocation7 + $0x14] sm:$0xf]
        %v514 = vld [vmem:[#allocation7 + $0x18] sm:$0xf]
        %v515 = vld [vmem:[#allocation7 + $0x1c] sm:$0xf]
        %v516 = vld [vmem:[#allocation7 + $0x20] sm:$0xf]
        %v517 = vld [vmem:[#allocation7 + $0x24] sm:$0xf]
        %v518 = vld [vmem:[#allocation7 + $0x28] sm:$0xf]
        %v519 = vld [vmem:[#allocation7 + $0x2c] sm:$0xf]
        %v520 = vld [vmem:[#allocation7 + $0x30] sm:$0xf]
        %v521 = vld [vmem:[#allocation7 + $0x34] sm:$0xf]
        %v522 = vld [vmem:[#allocation7 + $0x38] sm:$0xf]
        %v523 = vld [vmem:[#allocation7 + $0x3c] sm:$0xf]
        %v524 = vld [vmem:[#allocation7 + $0x40] sm:$0xf]
        %v525 = vld [vmem:[#allocation7 + $0x44] sm:$0xf]
        %v526 = vld [vmem:[#allocation7 + $0x48] sm:$0xf]
        %v527 = vld [vmem:[#allocation7 + $0x4c] sm:$0xf]
        %v528 = vld [vmem:[#allocation7 + $0x50] sm:$0xf]
        %v529 = vld [vmem:[#allocation7 + $0x54] sm:$0xf]
        %v530 = vld [vmem:[#allocation7 + $0x58] sm:$0xf]
        %v531 = vld [vmem:[#allocation7 + $0x5c] sm:$0xf]
        %v532 = vld [vmem:[#allocation7 + $0x60] sm:$0xf]
        %v533 = vld [vmem:[#allocation7 + $0x64] sm:$0xf]
        %v534 = vld [vmem:[#allocation7 + $0x68] sm:$0xf]
        %v535 = vld [vmem:[#allocation7 + $0x6c] sm:$0xf]
        %v536 = vld [vmem:[#allocation7 + $0x70] sm:$0xf]
        %v537 = vld [vmem:[#allocation7 + $0x74] sm:$0xf]
        %v538 = vld [vmem:[#allocation7 + $0x78] sm:$0xf]
        %v539 = vld [vmem:[#allocation7 + $0x7c] sm:$0xf]
        %v540 = vld [vmem:[#allocation7 + $0x80] sm:$0xf]
        %v541 = vld [vmem:[#allocation7 + $0x84] sm:$0xf]
        %v542 = vld [vmem:[#allocation7 + $0x88] sm:$0xf]
        %v543 = vld [vmem:[#allocation7 + $0x8c] sm:$0xf]
        %v544 = vld [vmem:[#allocation7 + $0x90] sm:$0xf]
        %v545 = vld [vmem:[#allocation7 + $0x94] sm:$0xf]
        %v546 = vld [vmem:[#allocation7 + $0x98] sm:$0xf]
        %v547 = vld [vmem:[#allocation7 + $0x9c] sm:$0xf]
        %v548 = vld [vmem:[#allocation7 + $0xa0] sm:$0xf]
        %v549 = vld [vmem:[#allocation7 + $0xa4] sm:$0xf]
        %v550 = vld [vmem:[#allocation7 + $0xa8] sm:$0xf]
        %v551 = vld [vmem:[#allocation7 + $0xac] sm:$0xf]
        %v552 = vld [vmem:[#allocation7 + $0xb0] sm:$0xf]
        %v553 = vld [vmem:[#allocation7 + $0xb4] sm:$0xf]
        %v554 = vld [vmem:[#allocation7 + $0xb8] sm:$0xf]
        %v555 = vld [vmem:[#allocation7 + $0xbc] sm:$0xf]
        %v556 = vperm.slane %v490, 0
        %v605 = vunpack.c.l.b16 %v508
        %v606 = vunpack.c.l.b16 %v509
        %v607 = vunpack.c.l.b16 %v510
        %v608 = vunpack.c.l.b16 %v511
        %v609 = vunpack.c.l.b16 %v512
        %v610 = vunpack.c.l.b16 %v513
        %v611 = vunpack.c.l.b16 %v514
        %v612 = vunpack.c.l.b16 %v515
        %v613 = vunpack.c.l.b16 %v516
        %v614 = vunpack.c.l.b16 %v517
        %v615 = vunpack.c.l.b16 %v518
        %v616 = vunpack.c.l.b16 %v519
        %v617 = vunpack.c.l.b16 %v520
        %v618 = vunpack.c.l.b16 %v521
        %v619 = vunpack.c.l.b16 %v522
        %v620 = vunpack.c.l.b16 %v523
        %v621 = vunpack.c.l.b16 %v524
        %v622 = vunpack.c.l.b16 %v525
        %v623 = vunpack.c.l.b16 %v526
        %v624 = vunpack.c.l.b16 %v527
        %v625 = vunpack.c.l.b16 %v528
        %v626 = vunpack.c.l.b16 %v529
        %v627 = vunpack.c.l.b16 %v530
        %v628 = vunpack.c.l.b16 %v531
        %v629 = vunpack.c.l.b16 %v532
        %v630 = vunpack.c.l.b16 %v533
        %v631 = vunpack.c.l.b16 %v534
        %v632 = vunpack.c.l.b16 %v535
        %v633 = vunpack.c.l.b16 %v536
        %v634 = vunpack.c.l.b16 %v537
        %v635 = vunpack.c.l.b16 %v538
        %v636 = vunpack.c.l.b16 %v539
        %v637 = vunpack.c.l.b16 %v540
        %v638 = vunpack.c.l.b16 %v541
        %v639 = vunpack.c.l.b16 %v542
        %v640 = vunpack.c.l.b16 %v543
        %v641 = vunpack.c.l.b16 %v544
        %v642 = vunpack.c.l.b16 %v545
        %v643 = vunpack.c.l.b16 %v546
        %v644 = vunpack.c.l.b16 %v547
        %v645 = vunpack.c.l.b16 %v548
        %v646 = vunpack.c.l.b16 %v549
        %v647 = vunpack.c.l.b16 %v550
        %v648 = vunpack.c.l.b16 %v551
        %v649 = vunpack.c.l.b16 %v552
        %v650 = vunpack.c.l.b16 %v553
        %v651 = vunpack.c.l.b16 %v554
        %v652 = vunpack.c.l.b16 %v555
        %v653 = vpack.c.b16 %v606, %v605
        %v654 = vpack.c.b16 %v608, %v607
        %v655 = vpack.c.b16 %v610, %v609
        %v656 = vpack.c.b16 %v612, %v611
        %v657 = vpack.c.b16 %v614, %v613
        %v658 = vpack.c.b16 %v616, %v615
        %v659 = vpack.c.b16 %v618, %v617
        %v660 = vpack.c.b16 %v620, %v619
        %v661 = vpack.c.b16 %v622, %v621
        %v662 = vpack.c.b16 %v624, %v623
        %v663 = vpack.c.b16 %v626, %v625
        %v664 = vpack.c.b16 %v628, %v627
        %v665 = vpack.c.b16 %v630, %v629
        %v666 = vpack.c.b16 %v632, %v631
        %v667 = vpack.c.b16 %v634, %v633
        %v668 = vpack.c.b16 %v636, %v635
        %v669 = vpack.c.b16 %v638, %v637
        %v670 = vpack.c.b16 %v640, %v639
        %v671 = vpack.c.b16 %v642, %v641
        %v672 = vpack.c.b16 %v644, %v643
        %v673 = vpack.c.b16 %v646, %v645
        %v674 = vpack.c.b16 %v648, %v647
        %v675 = vpack.c.b16 %v650, %v649
        %v676 = vpack.c.b16 %v652, %v651
        %701 = vmatpush.bf16.msra.mxu0 %v660
        %702 = vmatpush.bf16.msra.mxu0 %v659
        %703 = vmatpush.bf16.msra.mxu0 %v658
        %704 = vmatpush.bf16.msra.mxu0 %v657
        %705 = vmatpush.bf16.msra.mxu0 %v656
        %706 = vmatpush.bf16.msra.mxu0 %v655
        %707 = vmatpush.bf16.msra.mxu0 %v654
        %708 = vmatpush.bf16.msra.mxu0 %v653
        %709 = vmatmul.bf16.gmra.mxu0 %v505
        %v710 = vpop.f32.mrf.mxu0
        %v711 = vadd.f32 %v556, %v710
        %v712 = vpop.f32.mrf.mxu0
        %v713 = vadd.f32 %v556, %v712
        %714 = vdwg.mxu0
        %715 = vmatpush.bf16.msra.mxu0 %v668
        %716 = vmatpush.bf16.msra.mxu0 %v667
        %717 = vmatpush.bf16.msra.mxu0 %v666
        %718 = vmatpush.bf16.msra.mxu0 %v665
        %719 = vmatpush.bf16.msra.mxu0 %v664
        %720 = vmatpush.bf16.msra.mxu0 %v663
        %721 = vmatpush.bf16.msra.mxu0 %v662
        %722 = vmatpush.bf16.msra.mxu0 %v661
        %723 = vmatmul.bf16.gmra.mxu0 %v506
        %v724 = vpop.f32.mrf.mxu0
        %v725 = vadd.f32 %v711, %v724
        %v726 = vpop.f32.mrf.mxu0
        %v727 = vadd.f32 %v713, %v726
        %728 = vdwg.mxu0
        %729 = vmatpush.bf16.msra.mxu0 %v676
        %730 = vmatpush.bf16.msra.mxu0 %v675
        %731 = vmatpush.bf16.msra.mxu0 %v674
        %732 = vmatpush.bf16.msra.mxu0 %v673
        %733 = vmatpush.bf16.msra.mxu0 %v672
        %734 = vmatpush.bf16.msra.mxu0 %v671
        %735 = vmatpush.bf16.msra.mxu0 %v670
        %736 = vmatpush.bf16.msra.mxu0 %v669
        %737 = vmatmul.bf16.gmra.mxu0 %v507
        %v738 = vpop.f32.mrf.mxu0
        %v739 = vadd.f32 %v725, %v738
        %v740 = vpop.f32.mrf.mxu0
        %v741 = vadd.f32 %v727, %v740
        %742 = vdwg.mxu0
        %v743 = vmax.f32 %v739, 0.0
        %v744 = vmax.f32 %v741, 0.0
        %v745 = vld [vmem:[#allocation8 + $0x1] sm:$0x1]
        %v746 = vrot.slane %v743, 7
        %v747 = vrot.slane %v744, 7
        %v748 = vsel %vm493, %v746, %v747
        %v749 = vsel %vm493, %v747, %v746
        %v750 = vmul.f32 %v749, %v484
        %v751 = vmul.f32 %v748, %v485
        %v752 = vrot.slane %v743, 1
        %v753 = vrot.slane %v744, 1
        %v754 = vsel %vm500, %v752, %v753
        %v755 = vsel %vm500, %v753, %v752
        %v756 = vmul.f32 %v754, %v488
        %v757 = vmul.f32 %v755, %v489
        %v758 = vpack.c.bf16 %v751, %v750
        %v759 = vpack.c.bf16 %v744, %v743
        %v760 = vpack.c.bf16 %v757, %v756
        %s761 = scalar_lea.vmem [#allocation7], 192
        %v762 = vld [vmem:[%s761] sm:$0xf]
        %v763 = vld [vmem:[%s761 + $0x4] sm:$0xf]
        %v764 = vld [vmem:[%s761 + $0x8] sm:$0xf]
        %v765 = vld [vmem:[%s761 + $0xc] sm:$0xf]
        %v766 = vld [vmem:[%s761 + $0x10] sm:$0xf]
        %v767 = vld [vmem:[%s761 + $0x14] sm:$0xf]
        %v768 = vld [vmem:[%s761 + $0x18] sm:$0xf]
        %v769 = vld [vmem:[%s761 + $0x1c] sm:$0xf]
        %v770 = vld [vmem:[%s761 + $0x20] sm:$0xf]
        %v771 = vld [vmem:[%s761 + $0x24] sm:$0xf]
        %v772 = vld [vmem:[%s761 + $0x28] sm:$0xf]
        %v773 = vld [vmem:[%s761 + $0x2c] sm:$0xf]
        %v774 = vld [vmem:[%s761 + $0x30] sm:$0xf]
        %v775 = vld [vmem:[%s761 + $0x34] sm:$0xf]
        %v776 = vld [vmem:[%s761 + $0x38] sm:$0xf]
        %v777 = vld [vmem:[%s761 + $0x3c] sm:$0xf]
        %v778 = vld [vmem:[%s761 + $0x40] sm:$0xf]
        %v779 = vld [vmem:[%s761 + $0x44] sm:$0xf]
        %v780 = vld [vmem:[%s761 + $0x48] sm:$0xf]
        %v781 = vld [vmem:[%s761 + $0x4c] sm:$0xf]
        %v782 = vld [vmem:[%s761 + $0x50] sm:$0xf]
        %v783 = vld [vmem:[%s761 + $0x54] sm:$0xf]
        %v784 = vld [vmem:[%s761 + $0x58] sm:$0xf]
        %v785 = vld [vmem:[%s761 + $0x5c] sm:$0xf]
        %v786 = vld [vmem:[%s761 + $0x60] sm:$0xf]
        %v787 = vld [vmem:[%s761 + $0x64] sm:$0xf]
        %v788 = vld [vmem:[%s761 + $0x68] sm:$0xf]
        %v789 = vld [vmem:[%s761 + $0x6c] sm:$0xf]
        %v790 = vld [vmem:[%s761 + $0x70] sm:$0xf]
        %v791 = vld [vmem:[%s761 + $0x74] sm:$0xf]
        %v792 = vld [vmem:[%s761 + $0x78] sm:$0xf]
        %v793 = vld [vmem:[%s761 + $0x7c] sm:$0xf]
        %v794 = vld [vmem:[%s761 + $0x80] sm:$0xf]
        %v795 = vld [vmem:[%s761 + $0x84] sm:$0xf]
        %v796 = vld [vmem:[%s761 + $0x88] sm:$0xf]
        %v797 = vld [vmem:[%s761 + $0x8c] sm:$0xf]
        %v798 = vld [vmem:[%s761 + $0x90] sm:$0xf]
        %v799 = vld [vmem:[%s761 + $0x94] sm:$0xf]
        %v800 = vld [vmem:[%s761 + $0x98] sm:$0xf]
        %v801 = vld [vmem:[%s761 + $0x9c] sm:$0xf]
        %v802 = vld [vmem:[%s761 + $0xa0] sm:$0xf]
        %v803 = vld [vmem:[%s761 + $0xa4] sm:$0xf]
        %v804 = vld [vmem:[%s761 + $0xa8] sm:$0xf]
        %v805 = vld [vmem:[%s761 + $0xac] sm:$0xf]
        %v806 = vld [vmem:[%s761 + $0xb0] sm:$0xf]
        %v807 = vld [vmem:[%s761 + $0xb4] sm:$0xf]
        %v808 = vld [vmem:[%s761 + $0xb8] sm:$0xf]
        %v809 = vld [vmem:[%s761 + $0xbc] sm:$0xf]
        %v810 = vperm.slane %v745, 0
        %v859 = vunpack.c.l.b16 %v762
        %v860 = vunpack.c.l.b16 %v763
        %v861 = vunpack.c.l.b16 %v764
        %v862 = vunpack.c.l.b16 %v765
        %v863 = vunpack.c.l.b16 %v766
        %v864 = vunpack.c.l.b16 %v767
        %v865 = vunpack.c.l.b16 %v768
        %v866 = vunpack.c.l.b16 %v769
        %v867 = vunpack.c.l.b16 %v770
        %v868 = vunpack.c.l.b16 %v771
        %v869 = vunpack.c.l.b16 %v772
        %v870 = vunpack.c.l.b16 %v773
        %v871 = vunpack.c.l.b16 %v774
        %v872 = vunpack.c.l.b16 %v775
        %v873 = vunpack.c.l.b16 %v776
        %v874 = vunpack.c.l.b16 %v777
        %v875 = vunpack.c.l.b16 %v778
        %v876 = vunpack.c.l.b16 %v779
        %v877 = vunpack.c.l.b16 %v780
        %v878 = vunpack.c.l.b16 %v781
        %v879 = vunpack.c.l.b16 %v782
        %v880 = vunpack.c.l.b16 %v783
        %v881 = vunpack.c.l.b16 %v784
        %v882 = vunpack.c.l.b16 %v785
        %v883 = vunpack.c.l.b16 %v786
        %v884 = vunpack.c.l.b16 %v787
        %v885 = vunpack.c.l.b16 %v788
        %v886 = vunpack.c.l.b16 %v789
        %v887 = vunpack.c.l.b16 %v790
        %v888 = vunpack.c.l.b16 %v791
        %v889 = vunpack.c.l.b16 %v792
        %v890 = vunpack.c.l.b16 %v793
        %v891 = vunpack.c.l.b16 %v794
        %v892 = vunpack.c.l.b16 %v795
        %v893 = vunpack.c.l.b16 %v796
        %v894 = vunpack.c.l.b16 %v797
        %v895 = vunpack.c.l.b16 %v798
        %v896 = vunpack.c.l.b16 %v799
        %v897 = vunpack.c.l.b16 %v800
        %v898 = vunpack.c.l.b16 %v801
        %v899 = vunpack.c.l.b16 %v802
        %v900 = vunpack.c.l.b16 %v803
        %v901 = vunpack.c.l.b16 %v804
        %v902 = vunpack.c.l.b16 %v805
        %v903 = vunpack.c.l.b16 %v806
        %v904 = vunpack.c.l.b16 %v807
        %v905 = vunpack.c.l.b16 %v808
        %v906 = vunpack.c.l.b16 %v809
        %v907 = vpack.c.b16 %v860, %v859
        %v908 = vpack.c.b16 %v862, %v861
        %v909 = vpack.c.b16 %v864, %v863
        %v910 = vpack.c.b16 %v866, %v865
        %v911 = vpack.c.b16 %v868, %v867
        %v912 = vpack.c.b16 %v870, %v869
        %v913 = vpack.c.b16 %v872, %v871
        %v914 = vpack.c.b16 %v874, %v873
        %v915 = vpack.c.b16 %v876, %v875
        %v916 = vpack.c.b16 %v878, %v877
        %v917 = vpack.c.b16 %v880, %v879
        %v918 = vpack.c.b16 %v882, %v881
        %v919 = vpack.c.b16 %v884, %v883
        %v920 = vpack.c.b16 %v886, %v885
        %v921 = vpack.c.b16 %v888, %v887
        %v922 = vpack.c.b16 %v890, %v889
        %v923 = vpack.c.b16 %v892, %v891
        %v924 = vpack.c.b16 %v894, %v893
        %v925 = vpack.c.b16 %v896, %v895
        %v926 = vpack.c.b16 %v898, %v897
        %v927 = vpack.c.b16 %v900, %v899
        %v928 = vpack.c.b16 %v902, %v901
        %v929 = vpack.c.b16 %v904, %v903
        %v930 = vpack.c.b16 %v906, %v905
        %955 = vmatpush.bf16.msra.mxu0 %v914
        %956 = vmatpush.bf16.msra.mxu0 %v913
        %957 = vmatpush.bf16.msra.mxu0 %v912
        %958 = vmatpush.bf16.msra.mxu0 %v911
        %959 = vmatpush.bf16.msra.mxu0 %v910
        %960 = vmatpush.bf16.msra.mxu0 %v909
        %961 = vmatpush.bf16.msra.mxu0 %v908
        %962 = vmatpush.bf16.msra.mxu0 %v907
        %963 = vmatmul.bf16.gmra.mxu0 %v758
        %v964 = vpop.f32.mrf.mxu0
        %v965 = vadd.f32 %v810, %v964
        %v966 = vpop.f32.mrf.mxu0
        %v967 = vadd.f32 %v810, %v966
        %968 = vdwg.mxu0
        %969 = vmatpush.bf16.msra.mxu0 %v922
        %970 = vmatpush.bf16.msra.mxu0 %v921
        %971 = vmatpush.bf16.msra.mxu0 %v920
        %972 = vmatpush.bf16.msra.mxu0 %v919
        %973 = vmatpush.bf16.msra.mxu0 %v918
        %974 = vmatpush.bf16.msra.mxu0 %v917
        %975 = vmatpush.bf16.msra.mxu0 %v916
        %976 = vmatpush.bf16.msra.mxu0 %v915
        %977 = vmatmul.bf16.gmra.mxu0 %v759
        %v978 = vpop.f32.mrf.mxu0
        %v979 = vadd.f32 %v965, %v978
        %v980 = vpop.f32.mrf.mxu0
        %v981 = vadd.f32 %v967, %v980
        %982 = vdwg.mxu0
        %983 = vmatpush.bf16.msra.mxu0 %v930
        %984 = vmatpush.bf16.msra.mxu0 %v929
        %985 = vmatpush.bf16.msra.mxu0 %v928
        %986 = vmatpush.bf16.msra.mxu0 %v927
        %987 = vmatpush.bf16.msra.mxu0 %v926
        %988 = vmatpush.bf16.msra.mxu0 %v925
        %989 = vmatpush.bf16.msra.mxu0 %v924
        %990 = vmatpush.bf16.msra.mxu0 %v923
        %991 = vmatmul.bf16.gmra.mxu0 %v760
        %v992 = vpop.f32.mrf.mxu0
        %v993 = vadd.f32 %v979, %v992
        %v994 = vpop.f32.mrf.mxu0
        %v995 = vadd.f32 %v981, %v994
        %996 = vdwg.mxu0
        %v997 = vadd.f32 %v993, %v451
        %v998 = vadd.f32 %v995, %v452
        %v999 = vmax.f32 %v997, 0.0
        %v1000 = vmax.f32 %v998, 0.0
        %v1001 = vld [vmem:[#allocation8 + $0x2] sm:$0x1]
        %v1002 = vrot.slane %v999, 7
        %v1003 = vrot.slane %v1000, 7
        %v1004 = vsel %vm493, %v1002, %v1003
        %v1005 = vsel %vm493, %v1003, %v1002
        %v1006 = vmul.f32 %v1005, %v484
        %v1007 = vmul.f32 %v1004, %v485
        %v1008 = vrot.slane %v999, 1
        %v1009 = vrot.slane %v1000, 1
        %v1010 = vsel %vm500, %v1008, %v1009
        %v1011 = vsel %vm500, %v1009, %v1008
        %v1012 = vmul.f32 %v1010, %v488
        %v1013 = vmul.f32 %v1011, %v489
        %v1014 = vpack.c.bf16 %v1007, %v1006
        %v1015 = vpack.c.bf16 %v1000, %v999
        %v1016 = vpack.c.bf16 %v1013, %v1012
        %s1017 = scalar_lea.vmem [#allocation7], 384
        %v1018 = vld [vmem:[%s1017] sm:$0xf]
        %v1019 = vld [vmem:[%s1017 + $0x4] sm:$0xf]
        %v1020 = vld [vmem:[%s1017 + $0x8] sm:$0xf]
        %v1021 = vld [vmem:[%s1017 + $0xc] sm:$0xf]
        %v1022 = vld [vmem:[%s1017 + $0x10] sm:$0xf]
        %v1023 = vld [vmem:[%s1017 + $0x14] sm:$0xf]
        %v1024 = vld [vmem:[%s1017 + $0x18] sm:$0xf]
        %v1025 = vld [vmem:[%s1017 + $0x1c] sm:$0xf]
        %v1026 = vld [vmem:[%s1017 + $0x20] sm:$0xf]
        %v1027 = vld [vmem:[%s1017 + $0x24] sm:$0xf]
        %v1028 = vld [vmem:[%s1017 + $0x28] sm:$0xf]
        %v1029 = vld [vmem:[%s1017 + $0x2c] sm:$0xf]
        %v1030 = vld [vmem:[%s1017 + $0x30] sm:$0xf]
        %v1031 = vld [vmem:[%s1017 + $0x34] sm:$0xf]
        %v1032 = vld [vmem:[%s1017 + $0x38] sm:$0xf]
        %v1033 = vld [vmem:[%s1017 + $0x3c] sm:$0xf]
        %v1034 = vld [vmem:[%s1017 + $0x40] sm:$0xf]
        %v1035 = vld [vmem:[%s1017 + $0x44] sm:$0xf]
        %v1036 = vld [vmem:[%s1017 + $0x48] sm:$0xf]
        %v1037 = vld [vmem:[%s1017 + $0x4c] sm:$0xf]
        %v1038 = vld [vmem:[%s1017 + $0x50] sm:$0xf]
        %v1039 = vld [vmem:[%s1017 + $0x54] sm:$0xf]
        %v1040 = vld [vmem:[%s1017 + $0x58] sm:$0xf]
        %v1041 = vld [vmem:[%s1017 + $0x5c] sm:$0xf]
        %v1042 = vld [vmem:[%s1017 + $0x60] sm:$0xf]
        %v1043 = vld [vmem:[%s1017 + $0x64] sm:$0xf]
        %v1044 = vld [vmem:[%s1017 + $0x68] sm:$0xf]
        %v1045 = vld [vmem:[%s1017 + $0x6c] sm:$0xf]
        %v1046 = vld [vmem:[%s1017 + $0x70] sm:$0xf]
        %v1047 = vld [vmem:[%s1017 + $0x74] sm:$0xf]
        %v1048 = vld [vmem:[%s1017 + $0x78] sm:$0xf]
        %v1049 = vld [vmem:[%s1017 + $0x7c] sm:$0xf]
        %v1050 = vld [vmem:[%s1017 + $0x80] sm:$0xf]
        %v1051 = vld [vmem:[%s1017 + $0x84] sm:$0xf]
        %v1052 = vld [vmem:[%s1017 + $0x88] sm:$0xf]
        %v1053 = vld [vmem:[%s1017 + $0x8c] sm:$0xf]
        %v1054 = vld [vmem:[%s1017 + $0x90] sm:$0xf]
        %v1055 = vld [vmem:[%s1017 + $0x94] sm:$0xf]
        %v1056 = vld [vmem:[%s1017 + $0x98] sm:$0xf]
        %v1057 = vld [vmem:[%s1017 + $0x9c] sm:$0xf]
        %v1058 = vld [vmem:[%s1017 + $0xa0] sm:$0xf]
        %v1059 = vld [vmem:[%s1017 + $0xa4] sm:$0xf]
        %v1060 = vld [vmem:[%s1017 + $0xa8] sm:$0xf]
        %v1061 = vld [vmem:[%s1017 + $0xac] sm:$0xf]
        %v1062 = vld [vmem:[%s1017 + $0xb0] sm:$0xf]
        %v1063 = vld [vmem:[%s1017 + $0xb4] sm:$0xf]
        %v1064 = vld [vmem:[%s1017 + $0xb8] sm:$0xf]
        %v1065 = vld [vmem:[%s1017 + $0xbc] sm:$0xf]
        %v1066 = vperm.slane %v1001, 0
        %v1115 = vunpack.c.l.b16 %v1018
        %v1116 = vunpack.c.l.b16 %v1019
        %v1117 = vunpack.c.l.b16 %v1020
        %v1118 = vunpack.c.l.b16 %v1021
        %v1119 = vunpack.c.l.b16 %v1022
        %v1120 = vunpack.c.l.b16 %v1023
        %v1121 = vunpack.c.l.b16 %v1024
        %v1122 = vunpack.c.l.b16 %v1025
        %v1123 = vunpack.c.l.b16 %v1026
        %v1124 = vunpack.c.l.b16 %v1027
        %v1125 = vunpack.c.l.b16 %v1028
        %v1126 = vunpack.c.l.b16 %v1029
        %v1127 = vunpack.c.l.b16 %v1030
        %v1128 = vunpack.c.l.b16 %v1031
        %v1129 = vunpack.c.l.b16 %v1032
        %v1130 = vunpack.c.l.b16 %v1033
        %v1131 = vunpack.c.l.b16 %v1034
        %v1132 = vunpack.c.l.b16 %v1035
        %v1133 = vunpack.c.l.b16 %v1036
        %v1134 = vunpack.c.l.b16 %v1037
        %v1135 = vunpack.c.l.b16 %v1038
        %v1136 = vunpack.c.l.b16 %v1039
        %v1137 = vunpack.c.l.b16 %v1040
        %v1138 = vunpack.c.l.b16 %v1041
        %v1139 = vunpack.c.l.b16 %v1042
        %v1140 = vunpack.c.l.b16 %v1043
        %v1141 = vunpack.c.l.b16 %v1044
        %v1142 = vunpack.c.l.b16 %v1045
        %v1143 = vunpack.c.l.b16 %v1046
        %v1144 = vunpack.c.l.b16 %v1047
        %v1145 = vunpack.c.l.b16 %v1048
        %v1146 = vunpack.c.l.b16 %v1049
        %v1147 = vunpack.c.l.b16 %v1050
        %v1148 = vunpack.c.l.b16 %v1051
        %v1149 = vunpack.c.l.b16 %v1052
        %v1150 = vunpack.c.l.b16 %v1053
        %v1151 = vunpack.c.l.b16 %v1054
        %v1152 = vunpack.c.l.b16 %v1055
        %v1153 = vunpack.c.l.b16 %v1056
        %v1154 = vunpack.c.l.b16 %v1057
        %v1155 = vunpack.c.l.b16 %v1058
        %v1156 = vunpack.c.l.b16 %v1059
        %v1157 = vunpack.c.l.b16 %v1060
        %v1158 = vunpack.c.l.b16 %v1061
        %v1159 = vunpack.c.l.b16 %v1062
        %v1160 = vunpack.c.l.b16 %v1063
        %v1161 = vunpack.c.l.b16 %v1064
        %v1162 = vunpack.c.l.b16 %v1065
        %v1163 = vpack.c.b16 %v1116, %v1115
        %v1164 = vpack.c.b16 %v1118, %v1117
        %v1165 = vpack.c.b16 %v1120, %v1119
        %v1166 = vpack.c.b16 %v1122, %v1121
        %v1167 = vpack.c.b16 %v1124, %v1123
        %v1168 = vpack.c.b16 %v1126, %v1125
        %v1169 = vpack.c.b16 %v1128, %v1127
        %v1170 = vpack.c.b16 %v1130, %v1129
        %v1171 = vpack.c.b16 %v1132, %v1131
        %v1172 = vpack.c.b16 %v1134, %v1133
        %v1173 = vpack.c.b16 %v1136, %v1135
        %v1174 = vpack.c.b16 %v1138, %v1137
        %v1175 = vpack.c.b16 %v1140, %v1139
        %v1176 = vpack.c.b16 %v1142, %v1141
        %v1177 = vpack.c.b16 %v1144, %v1143
        %v1178 = vpack.c.b16 %v1146, %v1145
        %v1179 = vpack.c.b16 %v1148, %v1147
        %v1180 = vpack.c.b16 %v1150, %v1149
        %v1181 = vpack.c.b16 %v1152, %v1151
        %v1182 = vpack.c.b16 %v1154, %v1153
        %v1183 = vpack.c.b16 %v1156, %v1155
        %v1184 = vpack.c.b16 %v1158, %v1157
        %v1185 = vpack.c.b16 %v1160, %v1159
        %v1186 = vpack.c.b16 %v1162, %v1161
        %1211 = vmatpush.bf16.msra.mxu0 %v1170
        %1212 = vmatpush.bf16.msra.mxu0 %v1169
        %1213 = vmatpush.bf16.msra.mxu0 %v1168
        %1214 = vmatpush.bf16.msra.mxu0 %v1167
        %1215 = vmatpush.bf16.msra.mxu0 %v1166
        %1216 = vmatpush.bf16.msra.mxu0 %v1165
        %1217 = vmatpush.bf16.msra.mxu0 %v1164
        %1218 = vmatpush.bf16.msra.mxu0 %v1163
        %1219 = vmatmul.bf16.gmra.mxu0 %v1014
        %v1220 = vpop.f32.mrf.mxu0
        %v1221 = vadd.f32 %v1066, %v1220
        %v1222 = vpop.f32.mrf.mxu0
        %v1223 = vadd.f32 %v1066, %v1222
        %1224 = vdwg.mxu0
        %1225 = vmatpush.bf16.msra.mxu0 %v1178
        %1226 = vmatpush.bf16.msra.mxu0 %v1177
        %1227 = vmatpush.bf16.msra.mxu0 %v1176
        %1228 = vmatpush.bf16.msra.mxu0 %v1175
        %1229 = vmatpush.bf16.msra.mxu0 %v1174
        %1230 = vmatpush.bf16.msra.mxu0 %v1173
        %1231 = vmatpush.bf16.msra.mxu0 %v1172
        %1232 = vmatpush.bf16.msra.mxu0 %v1171
        %1233 = vmatmul.bf16.gmra.mxu0 %v1015
        %v1234 = vpop.f32.mrf.mxu0
        %v1235 = vadd.f32 %v1221, %v1234
        %v1236 = vpop.f32.mrf.mxu0
        %v1237 = vadd.f32 %v1223, %v1236
        %1238 = vdwg.mxu0
        %1239 = vmatpush.bf16.msra.mxu0 %v1186
        %1240 = vmatpush.bf16.msra.mxu0 %v1185
        %1241 = vmatpush.bf16.msra.mxu0 %v1184
        %1242 = vmatpush.bf16.msra.mxu0 %v1183
        %1243 = vmatpush.bf16.msra.mxu0 %v1182
        %1244 = vmatpush.bf16.msra.mxu0 %v1181
        %1245 = vmatpush.bf16.msra.mxu0 %v1180
        %1246 = vmatpush.bf16.msra.mxu0 %v1179
        %1247 = vmatmul.bf16.gmra.mxu0 %v1016
        %v1248 = vpop.f32.mrf.mxu0
        %v1249 = vadd.f32 %v1235, %v1248
        %v1250 = vpop.f32.mrf.mxu0
        %v1251 = vadd.f32 %v1237, %v1250
        %1252 = vdwg.mxu0
        %v1253 = vmax.f32 %v1249, 0.0
        %v1254 = vmax.f32 %v1251, 0.0
        %v1255 = vld [vmem:[#allocation8 + $0x3] sm:$0x1]
        %v1256 = vrot.slane %v1253, 7
        %v1257 = vrot.slane %v1254, 7
        %v1258 = vsel %vm493, %v1256, %v1257
        %v1259 = vsel %vm493, %v1257, %v1256
        %v1260 = vmul.f32 %v1259, %v484
        %v1261 = vmul.f32 %v1258, %v485
        %v1262 = vrot.slane %v1253, 1
        %v1263 = vrot.slane %v1254, 1
        %v1264 = vsel %vm500, %v1262, %v1263
        %v1265 = vsel %vm500, %v1263, %v1262
        %v1266 = vmul.f32 %v1264, %v488
        %v1267 = vmul.f32 %v1265, %v489
        %v1268 = vpack.c.bf16 %v1261, %v1260
        %v1269 = vpack.c.bf16 %v1254, %v1253
        %v1270 = vpack.c.bf16 %v1267, %v1266
        %s1271 = scalar_lea.vmem [#allocation7], 576
        %v1272 = vld [vmem:[%s1271] sm:$0xf]
        %v1273 = vld [vmem:[%s1271 + $0x4] sm:$0xf]
        %v1274 = vld [vmem:[%s1271 + $0x8] sm:$0xf]
        %v1275 = vld [vmem:[%s1271 + $0xc] sm:$0xf]
        %v1276 = vld [vmem:[%s1271 + $0x10] sm:$0xf]
        %v1277 = vld [vmem:[%s1271 + $0x14] sm:$0xf]
        %v1278 = vld [vmem:[%s1271 + $0x18] sm:$0xf]
        %v1279 = vld [vmem:[%s1271 + $0x1c] sm:$0xf]
        %v1280 = vld [vmem:[%s1271 + $0x20] sm:$0xf]
        %v1281 = vld [vmem:[%s1271 + $0x24] sm:$0xf]
        %v1282 = vld [vmem:[%s1271 + $0x28] sm:$0xf]
        %v1283 = vld [vmem:[%s1271 + $0x2c] sm:$0xf]
        %v1284 = vld [vmem:[%s1271 + $0x30] sm:$0xf]
        %v1285 = vld [vmem:[%s1271 + $0x34] sm:$0xf]
        %v1286 = vld [vmem:[%s1271 + $0x38] sm:$0xf]
        %v1287 = vld [vmem:[%s1271 + $0x3c] sm:$0xf]
        %v1288 = vld [vmem:[%s1271 + $0x40] sm:$0xf]
        %v1289 = vld [vmem:[%s1271 + $0x44] sm:$0xf]
        %v1290 = vld [vmem:[%s1271 + $0x48] sm:$0xf]
        %v1291 = vld [vmem:[%s1271 + $0x4c] sm:$0xf]
        %v1292 = vld [vmem:[%s1271 + $0x50] sm:$0xf]
        %v1293 = vld [vmem:[%s1271 + $0x54] sm:$0xf]
        %v1294 = vld [vmem:[%s1271 + $0x58] sm:$0xf]
        %v1295 = vld [vmem:[%s1271 + $0x5c] sm:$0xf]
        %v1296 = vld [vmem:[%s1271 + $0x60] sm:$0xf]
        %v1297 = vld [vmem:[%s1271 + $0x64] sm:$0xf]
        %v1298 = vld [vmem:[%s1271 + $0x68] sm:$0xf]
        %v1299 = vld [vmem:[%s1271 + $0x6c] sm:$0xf]
        %v1300 = vld [vmem:[%s1271 + $0x70] sm:$0xf]
        %v1301 = vld [vmem:[%s1271 + $0x74] sm:$0xf]
        %v1302 = vld [vmem:[%s1271 + $0x78] sm:$0xf]
        %v1303 = vld [vmem:[%s1271 + $0x7c] sm:$0xf]
        %v1304 = vld [vmem:[%s1271 + $0x80] sm:$0xf]
        %v1305 = vld [vmem:[%s1271 + $0x84] sm:$0xf]
        %v1306 = vld [vmem:[%s1271 + $0x88] sm:$0xf]
        %v1307 = vld [vmem:[%s1271 + $0x8c] sm:$0xf]
        %v1308 = vld [vmem:[%s1271 + $0x90] sm:$0xf]
        %v1309 = vld [vmem:[%s1271 + $0x94] sm:$0xf]
        %v1310 = vld [vmem:[%s1271 + $0x98] sm:$0xf]
        %v1311 = vld [vmem:[%s1271 + $0x9c] sm:$0xf]
        %v1312 = vld [vmem:[%s1271 + $0xa0] sm:$0xf]
        %v1313 = vld [vmem:[%s1271 + $0xa4] sm:$0xf]
        %v1314 = vld [vmem:[%s1271 + $0xa8] sm:$0xf]
        %v1315 = vld [vmem:[%s1271 + $0xac] sm:$0xf]
        %v1316 = vld [vmem:[%s1271 + $0xb0] sm:$0xf]
        %v1317 = vld [vmem:[%s1271 + $0xb4] sm:$0xf]
        %v1318 = vld [vmem:[%s1271 + $0xb8] sm:$0xf]
        %v1319 = vld [vmem:[%s1271 + $0xbc] sm:$0xf]
        %v1320 = vperm.slane %v1255, 0
        %v1369 = vunpack.c.l.b16 %v1272
        %v1370 = vunpack.c.l.b16 %v1273
        %v1371 = vunpack.c.l.b16 %v1274
        %v1372 = vunpack.c.l.b16 %v1275
        %v1373 = vunpack.c.l.b16 %v1276
        %v1374 = vunpack.c.l.b16 %v1277
        %v1375 = vunpack.c.l.b16 %v1278
        %v1376 = vunpack.c.l.b16 %v1279
        %v1377 = vunpack.c.l.b16 %v1280
        %v1378 = vunpack.c.l.b16 %v1281
        %v1379 = vunpack.c.l.b16 %v1282
        %v1380 = vunpack.c.l.b16 %v1283
        %v1381 = vunpack.c.l.b16 %v1284
        %v1382 = vunpack.c.l.b16 %v1285
        %v1383 = vunpack.c.l.b16 %v1286
        %v1384 = vunpack.c.l.b16 %v1287
        %v1385 = vunpack.c.l.b16 %v1288
        %v1386 = vunpack.c.l.b16 %v1289
        %v1387 = vunpack.c.l.b16 %v1290
        %v1388 = vunpack.c.l.b16 %v1291
        %v1389 = vunpack.c.l.b16 %v1292
        %v1390 = vunpack.c.l.b16 %v1293
        %v1391 = vunpack.c.l.b16 %v1294
        %v1392 = vunpack.c.l.b16 %v1295
        %v1393 = vunpack.c.l.b16 %v1296
        %v1394 = vunpack.c.l.b16 %v1297
        %v1395 = vunpack.c.l.b16 %v1298
        %v1396 = vunpack.c.l.b16 %v1299
        %v1397 = vunpack.c.l.b16 %v1300
        %v1398 = vunpack.c.l.b16 %v1301
        %v1399 = vunpack.c.l.b16 %v1302
        %v1400 = vunpack.c.l.b16 %v1303
        %v1401 = vunpack.c.l.b16 %v1304
        %v1402 = vunpack.c.l.b16 %v1305
        %v1403 = vunpack.c.l.b16 %v1306
        %v1404 = vunpack.c.l.b16 %v1307
        %v1405 = vunpack.c.l.b16 %v1308
        %v1406 = vunpack.c.l.b16 %v1309
        %v1407 = vunpack.c.l.b16 %v1310
        %v1408 = vunpack.c.l.b16 %v1311
        %v1409 = vunpack.c.l.b16 %v1312
        %v1410 = vunpack.c.l.b16 %v1313
        %v1411 = vunpack.c.l.b16 %v1314
        %v1412 = vunpack.c.l.b16 %v1315
        %v1413 = vunpack.c.l.b16 %v1316
        %v1414 = vunpack.c.l.b16 %v1317
        %v1415 = vunpack.c.l.b16 %v1318
        %v1416 = vunpack.c.l.b16 %v1319
        %v1417 = vpack.c.b16 %v1370, %v1369
        %v1418 = vpack.c.b16 %v1372, %v1371
        %v1419 = vpack.c.b16 %v1374, %v1373
        %v1420 = vpack.c.b16 %v1376, %v1375
        %v1421 = vpack.c.b16 %v1378, %v1377
        %v1422 = vpack.c.b16 %v1380, %v1379
        %v1423 = vpack.c.b16 %v1382, %v1381
        %v1424 = vpack.c.b16 %v1384, %v1383
        %v1425 = vpack.c.b16 %v1386, %v1385
        %v1426 = vpack.c.b16 %v1388, %v1387
        %v1427 = vpack.c.b16 %v1390, %v1389
        %v1428 = vpack.c.b16 %v1392, %v1391
        %v1429 = vpack.c.b16 %v1394, %v1393
        %v1430 = vpack.c.b16 %v1396, %v1395
        %v1431 = vpack.c.b16 %v1398, %v1397
        %v1432 = vpack.c.b16 %v1400, %v1399
        %v1433 = vpack.c.b16 %v1402, %v1401
        %v1434 = vpack.c.b16 %v1404, %v1403
        %v1435 = vpack.c.b16 %v1406, %v1405
        %v1436 = vpack.c.b16 %v1408, %v1407
        %v1437 = vpack.c.b16 %v1410, %v1409
        %v1438 = vpack.c.b16 %v1412, %v1411
        %v1439 = vpack.c.b16 %v1414, %v1413
        %v1440 = vpack.c.b16 %v1416, %v1415
        %1465 = vmatpush.bf16.msra.mxu0 %v1424
        %1466 = vmatpush.bf16.msra.mxu0 %v1423
        %1467 = vmatpush.bf16.msra.mxu0 %v1422
        %1468 = vmatpush.bf16.msra.mxu0 %v1421
        %1469 = vmatpush.bf16.msra.mxu0 %v1420
        %1470 = vmatpush.bf16.msra.mxu0 %v1419
        %1471 = vmatpush.bf16.msra.mxu0 %v1418
        %1472 = vmatpush.bf16.msra.mxu0 %v1417
        %1473 = vmatmul.bf16.gmra.mxu0 %v1268
        %v1474 = vpop.f32.mrf.mxu0
        %v1475 = vadd.f32 %v1320, %v1474
        %v1476 = vpop.f32.mrf.mxu0
        %v1477 = vadd.f32 %v1320, %v1476
        %1478 = vdwg.mxu0
        %1479 = vmatpush.bf16.msra.mxu0 %v1432
        %1480 = vmatpush.bf16.msra.mxu0 %v1431
        %1481 = vmatpush.bf16.msra.mxu0 %v1430
        %1482 = vmatpush.bf16.msra.mxu0 %v1429
        %1483 = vmatpush.bf16.msra.mxu0 %v1428
        %1484 = vmatpush.bf16.msra.mxu0 %v1427
        %1485 = vmatpush.bf16.msra.mxu0 %v1426
        %1486 = vmatpush.bf16.msra.mxu0 %v1425
        %1487 = vmatmul.bf16.gmra.mxu0 %v1269
        %v1488 = vpop.f32.mrf.mxu0
        %v1489 = vadd.f32 %v1475, %v1488
        %v1490 = vpop.f32.mrf.mxu0
        %v1491 = vadd.f32 %v1477, %v1490
        %1492 = vdwg.mxu0
        %1493 = vmatpush.bf16.msra.mxu0 %v1440
        %1494 = vmatpush.bf16.msra.mxu0 %v1439
        %1495 = vmatpush.bf16.msra.mxu0 %v1438
        %1496 = vmatpush.bf16.msra.mxu0 %v1437
        %1497 = vmatpush.bf16.msra.mxu0 %v1436
        %1498 = vmatpush.bf16.msra.mxu0 %v1435
        %1499 = vmatpush.bf16.msra.mxu0 %v1434
        %1500 = vmatpush.bf16.msra.mxu0 %v1433
        %1501 = vmatmul.bf16.gmra.mxu0 %v1270
        %v1502 = vpop.f32.mrf.mxu0
        %v1503 = vadd.f32 %v1489, %v1502
        %v1504 = vpop.f32.mrf.mxu0
        %v1505 = vadd.f32 %v1491, %v1504
        %1506 = vdwg.mxu0
        %v1507 = vpack.c.bf16 %v1505, %v1503
        %v1508 = vpack.c.bf16 %v454, %v453
        %v1509 = vld [vmem:[#allocation10] sm:$0xff]
        %v1510 = vld [vmem:[#allocation10 + $0x8] sm:$0xff]
        %v1511 = vld [vmem:[#allocation10 + $0x10] sm:$0xff]
        %v1512 = vld [vmem:[#allocation10 + $0x18] sm:$0xff]
        %v1513 = vld [vmem:[#allocation10 + $0x20] sm:$0xff]
        %v1514 = vld [vmem:[#allocation10 + $0x28] sm:$0xff]
        %v1515 = vld [vmem:[#allocation10 + $0x30] sm:$0xff]
        %v1516 = vld [vmem:[#allocation10 + $0x38] sm:$0xff]
        %v1517 = vld [vmem:[#allocation10 + $0x40] sm:$0xff]
        %v1518 = vld [vmem:[#allocation10 + $0x48] sm:$0xff]
        %v1519 = vld [vmem:[#allocation10 + $0x50] sm:$0xff]
        %v1520 = vld [vmem:[#allocation10 + $0x58] sm:$0xff]
        %v1521 = vld [vmem:[#allocation10 + $0x60] sm:$0xff]
        %v1522 = vld [vmem:[#allocation10 + $0x68] sm:$0xff]
        %v1523 = vld [vmem:[#allocation10 + $0x70] sm:$0xff]
        %v1524 = vld [vmem:[#allocation10 + $0x78] sm:$0xff]
        %v1525 = vld [vmem:[#allocation10 + $0x80] sm:$0xff]
        %v1526 = vld [vmem:[#allocation10 + $0x88] sm:$0xff]
        %v1527 = vld [vmem:[#allocation10 + $0x90] sm:$0xff]
        %v1528 = vld [vmem:[#allocation10 + $0x98] sm:$0xff]
        %v1529 = vld [vmem:[#allocation10 + $0xa0] sm:$0xff]
        %v1530 = vld [vmem:[#allocation10 + $0xa8] sm:$0xff]
        %v1531 = vld [vmem:[#allocation10 + $0xb0] sm:$0xff]
        %v1532 = vld [vmem:[#allocation10 + $0xb8] sm:$0xff]
        %v1533 = vld [vmem:[#allocation10 + $0xc0] sm:$0xff]
        %v1534 = vld [vmem:[#allocation10 + $0xc8] sm:$0xff]
        %v1535 = vld [vmem:[#allocation10 + $0xd0] sm:$0xff]
        %v1536 = vld [vmem:[#allocation10 + $0xd8] sm:$0xff]
        %v1537 = vld [vmem:[#allocation10 + $0xe0] sm:$0xff]
        %v1538 = vld [vmem:[#allocation10 + $0xe8] sm:$0xff]
        %v1539 = vld [vmem:[#allocation10 + $0xf0] sm:$0xff]
        %v1540 = vld [vmem:[#allocation10 + $0xf8] sm:$0xff]
        %v1541 = vld [vmem:[%s5] sm:$0x3]
        %v1543 = vperm.slane %v1541, 0
        %v1544 = vperm.slane %v1541, 1
        %v1579 = vunpack.c.l.b16 %v1509
        %v1580 = vunpack.c.h.b16 %v1509
        %v1581 = vunpack.c.l.b16 %v1510
        %v1582 = vunpack.c.h.b16 %v1510
        %v1583 = vunpack.c.l.b16 %v1511
        %v1584 = vunpack.c.h.b16 %v1511
        %v1585 = vunpack.c.l.b16 %v1512
        %v1586 = vunpack.c.h.b16 %v1512
        %v1587 = vunpack.c.l.b16 %v1513
        %v1588 = vunpack.c.h.b16 %v1513
        %v1589 = vunpack.c.l.b16 %v1514
        %v1590 = vunpack.c.h.b16 %v1514
        %v1591 = vunpack.c.l.b16 %v1515
        %v1592 = vunpack.c.h.b16 %v1515
        %v1593 = vunpack.c.l.b16 %v1516
        %v1594 = vunpack.c.h.b16 %v1516
        %v1595 = vunpack.c.l.b16 %v1517
        %v1596 = vunpack.c.h.b16 %v1517
        %v1597 = vunpack.c.l.b16 %v1518
        %v1598 = vunpack.c.h.b16 %v1518
        %v1599 = vunpack.c.l.b16 %v1519
        %v1600 = vunpack.c.h.b16 %v1519
        %v1601 = vunpack.c.l.b16 %v1520
        %v1602 = vunpack.c.h.b16 %v1520
        %v1603 = vunpack.c.l.b16 %v1521
        %v1604 = vunpack.c.h.b16 %v1521
        %v1605 = vunpack.c.l.b16 %v1522
        %v1606 = vunpack.c.h.b16 %v1522
        %v1607 = vunpack.c.l.b16 %v1523
        %v1608 = vunpack.c.h.b16 %v1523
        %v1609 = vunpack.c.l.b16 %v1524
        %v1610 = vunpack.c.h.b16 %v1524
        %v1611 = vunpack.c.l.b16 %v1525
        %v1612 = vunpack.c.h.b16 %v1525
        %v1613 = vunpack.c.l.b16 %v1526
        %v1614 = vunpack.c.h.b16 %v1526
        %v1615 = vunpack.c.l.b16 %v1527
        %v1616 = vunpack.c.h.b16 %v1527
        %v1617 = vunpack.c.l.b16 %v1528
        %v1618 = vunpack.c.h.b16 %v1528
        %v1619 = vunpack.c.l.b16 %v1529
        %v1620 = vunpack.c.h.b16 %v1529
        %v1621 = vunpack.c.l.b16 %v1530
        %v1622 = vunpack.c.h.b16 %v1530
        %v1623 = vunpack.c.l.b16 %v1531
        %v1624 = vunpack.c.h.b16 %v1531
        %v1625 = vunpack.c.l.b16 %v1532
        %v1626 = vunpack.c.h.b16 %v1532
        %v1627 = vunpack.c.l.b16 %v1533
        %v1628 = vunpack.c.h.b16 %v1533
        %v1629 = vunpack.c.l.b16 %v1534
        %v1630 = vunpack.c.h.b16 %v1534
        %v1631 = vunpack.c.l.b16 %v1535
        %v1632 = vunpack.c.h.b16 %v1535
        %v1633 = vunpack.c.l.b16 %v1536
        %v1634 = vunpack.c.h.b16 %v1536
        %v1635 = vunpack.c.l.b16 %v1537
        %v1636 = vunpack.c.h.b16 %v1537
        %v1637 = vunpack.c.l.b16 %v1538
        %v1638 = vunpack.c.h.b16 %v1538
        %v1639 = vunpack.c.l.b16 %v1539
        %v1640 = vunpack.c.h.b16 %v1539
        %v1641 = vunpack.c.l.b16 %v1540
        %v1642 = vunpack.c.h.b16 %v1540
        %v1643 = vpack.c.b16 %v1581, %v1579
        %v1644 = vpack.c.b16 %v1582, %v1580
        %v1645 = vpack.c.b16 %v1585, %v1583
        %v1646 = vpack.c.b16 %v1586, %v1584
        %v1647 = vpack.c.b16 %v1589, %v1587
        %v1648 = vpack.c.b16 %v1590, %v1588
        %v1649 = vpack.c.b16 %v1593, %v1591
        %v1650 = vpack.c.b16 %v1594, %v1592
        %v1651 = vpack.c.b16 %v1597, %v1595
        %v1652 = vpack.c.b16 %v1598, %v1596
        %v1653 = vpack.c.b16 %v1601, %v1599
        %v1654 = vpack.c.b16 %v1602, %v1600
        %v1655 = vpack.c.b16 %v1605, %v1603
        %v1656 = vpack.c.b16 %v1606, %v1604
        %v1657 = vpack.c.b16 %v1609, %v1607
        %v1658 = vpack.c.b16 %v1610, %v1608
        %v1659 = vpack.c.b16 %v1613, %v1611
        %v1660 = vpack.c.b16 %v1614, %v1612
        %v1661 = vpack.c.b16 %v1617, %v1615
        %v1662 = vpack.c.b16 %v1618, %v1616
        %v1663 = vpack.c.b16 %v1621, %v1619
        %v1664 = vpack.c.b16 %v1622, %v1620
        %v1665 = vpack.c.b16 %v1625, %v1623
        %v1666 = vpack.c.b16 %v1626, %v1624
        %v1667 = vpack.c.b16 %v1629, %v1627
        %v1668 = vpack.c.b16 %v1630, %v1628
        %v1669 = vpack.c.b16 %v1633, %v1631
        %v1670 = vpack.c.b16 %v1634, %v1632
        %v1671 = vpack.c.b16 %v1637, %v1635
        %v1672 = vpack.c.b16 %v1638, %v1636
        %v1673 = vpack.c.b16 %v1641, %v1639
        %v1674 = vpack.c.b16 %v1642, %v1640
        %1707 = vmatpush.bf16.msra.mxu0 %v1657
        %1708 = vmatpush.bf16.msra.mxu0 %v1655
        %1709 = vmatpush.bf16.msra.mxu0 %v1653
        %1710 = vmatpush.bf16.msra.mxu0 %v1651
        %1711 = vmatpush.bf16.msra.mxu0 %v1649
        %1712 = vmatpush.bf16.msra.mxu0 %v1647
        %1713 = vmatpush.bf16.msra.mxu0 %v1645
        %1714 = vmatpush.bf16.msra.mxu0 %v1643
        %1715 = vmatmul.bf16.gmra.mxu0 %v1507
        %v1716 = vpop.f32.mrf.mxu0
        %v1717 = vadd.f32 %v1543, %v1716
        %v1718 = vpop.f32.mrf.mxu0
        %v1719 = vadd.f32 %v1543, %v1718
        %1720 = vdwg.mxu0
        %1721 = vmatpush.bf16.msra.mxu0 %v1673
        %1722 = vmatpush.bf16.msra.mxu0 %v1671
        %1723 = vmatpush.bf16.msra.mxu0 %v1669
        %1724 = vmatpush.bf16.msra.mxu0 %v1667
        %1725 = vmatpush.bf16.msra.mxu0 %v1665
        %1726 = vmatpush.bf16.msra.mxu0 %v1663
        %1727 = vmatpush.bf16.msra.mxu0 %v1661
        %1728 = vmatpush.bf16.msra.mxu0 %v1659
        %1729 = vmatmul.bf16.gmra.mxu0 %v1508
        %v1730 = vpop.f32.mrf.mxu0
        %v1731 = vadd.f32 %v1717, %v1730
        %v1732 = vpop.f32.mrf.mxu0
        %v1733 = vadd.f32 %v1719, %v1732
        %1734 = vdwg.mxu0
        %1735 = vmatpush.bf16.msra.mxu0 %v1658
        %1736 = vmatpush.bf16.msra.mxu0 %v1656
        %1737 = vmatpush.bf16.msra.mxu0 %v1654
        %1738 = vmatpush.bf16.msra.mxu0 %v1652
        %1739 = vmatpush.bf16.msra.mxu0 %v1650
        %1740 = vmatpush.bf16.msra.mxu0 %v1648
        %1741 = vmatpush.bf16.msra.mxu0 %v1646
        %1742 = vmatpush.bf16.msra.mxu0 %v1644
        %1743 = vmatmul.bf16.gmra.mxu0 %v1507
        %v1744 = vpop.f32.mrf.mxu0
        %v1745 = vadd.f32 %v1544, %v1744
        %v1746 = vpop.f32.mrf.mxu0
        %v1747 = vadd.f32 %v1544, %v1746
        %1748 = vdwg.mxu0
        %1749 = vmatpush.bf16.msra.mxu0 %v1674
        %1750 = vmatpush.bf16.msra.mxu0 %v1672
        %1751 = vmatpush.bf16.msra.mxu0 %v1670
        %1752 = vmatpush.bf16.msra.mxu0 %v1668
        %1753 = vmatpush.bf16.msra.mxu0 %v1666
        %1754 = vmatpush.bf16.msra.mxu0 %v1664
        %1755 = vmatpush.bf16.msra.mxu0 %v1662
        %1756 = vmatpush.bf16.msra.mxu0 %v1660
        %1757 = vmatmul.bf16.gmra.mxu0 %v1508
        %v1758 = vpop.f32.mrf.mxu0
        %v1759 = vadd.f32 %v1745, %v1758
        %v1760 = vpop.f32.mrf.mxu0
        %v1761 = vadd.f32 %v1747, %v1760
        %1762 = vdwg.mxu0
        %v1763 = vmax.f32 %v1731, 0.0
        %v1764 = vmax.f32 %v1759, 0.0
        %v1765 = vmax.f32 %v1733, 0.0
        %v1766 = vmax.f32 %v1761, 0.0
        %v1767 = vpack.c.bf16 %v1765, %v1763
        %v1768 = vpack.c.bf16 %v1766, %v1764
        %v1769 = vld [vmem:[#allocation11] sm:$0xf]
        %v1770 = vld [vmem:[#allocation11 + $0x4] sm:$0xf]
        %v1771 = vld [vmem:[#allocation11 + $0x8] sm:$0xf]
        %v1772 = vld [vmem:[#allocation11 + $0xc] sm:$0xf]
        %v1773 = vld [vmem:[#allocation11 + $0x10] sm:$0xf]
        %v1774 = vld [vmem:[#allocation11 + $0x14] sm:$0xf]
        %v1775 = vld [vmem:[#allocation11 + $0x18] sm:$0xf]
        %v1776 = vld [vmem:[#allocation11 + $0x1c] sm:$0xf]
        %v1777 = vld [vmem:[#allocation11 + $0x20] sm:$0xf]
        %v1778 = vld [vmem:[#allocation11 + $0x24] sm:$0xf]
        %v1779 = vld [vmem:[#allocation11 + $0x28] sm:$0xf]
        %v1780 = vld [vmem:[#allocation11 + $0x2c] sm:$0xf]
        %v1781 = vld [vmem:[#allocation11 + $0x30] sm:$0xf]
        %v1782 = vld [vmem:[#allocation11 + $0x34] sm:$0xf]
        %v1783 = vld [vmem:[#allocation11 + $0x38] sm:$0xf]
        %v1784 = vld [vmem:[#allocation11 + $0x3c] sm:$0xf]
        %v1785 = vld [vmem:[#allocation11 + $0x40] sm:$0xf]
        %v1786 = vld [vmem:[#allocation11 + $0x44] sm:$0xf]
        %v1787 = vld [vmem:[#allocation11 + $0x48] sm:$0xf]
        %v1788 = vld [vmem:[#allocation11 + $0x4c] sm:$0xf]
        %v1789 = vld [vmem:[#allocation11 + $0x50] sm:$0xf]
        %v1790 = vld [vmem:[#allocation11 + $0x54] sm:$0xf]
        %v1791 = vld [vmem:[#allocation11 + $0x58] sm:$0xf]
        %v1792 = vld [vmem:[#allocation11 + $0x5c] sm:$0xf]
        %v1793 = vld [vmem:[#allocation11 + $0x60] sm:$0xf]
        %v1794 = vld [vmem:[#allocation11 + $0x64] sm:$0xf]
        %v1795 = vld [vmem:[#allocation11 + $0x68] sm:$0xf]
        %v1796 = vld [vmem:[#allocation11 + $0x6c] sm:$0xf]
        %v1797 = vld [vmem:[#allocation11 + $0x70] sm:$0xf]
        %v1798 = vld [vmem:[#allocation11 + $0x74] sm:$0xf]
        %v1799 = vld [vmem:[#allocation11 + $0x78] sm:$0xf]
        %v1800 = vld [vmem:[#allocation11 + $0x7c] sm:$0xf]
        %v1801 = vld [vmem:[#allocation8 + $0x4] sm:$0x1]
        %v1802 = vperm.slane %v1801, 0
        %v1835 = vunpack.c.l.b16 %v1769
        %v1836 = vunpack.c.l.b16 %v1770
        %v1837 = vunpack.c.l.b16 %v1771
        %v1838 = vunpack.c.l.b16 %v1772
        %v1839 = vunpack.c.l.b16 %v1773
        %v1840 = vunpack.c.l.b16 %v1774
        %v1841 = vunpack.c.l.b16 %v1775
        %v1842 = vunpack.c.l.b16 %v1776
        %v1843 = vunpack.c.l.b16 %v1777
        %v1844 = vunpack.c.l.b16 %v1778
        %v1845 = vunpack.c.l.b16 %v1779
        %v1846 = vunpack.c.l.b16 %v1780
        %v1847 = vunpack.c.l.b16 %v1781
        %v1848 = vunpack.c.l.b16 %v1782
        %v1849 = vunpack.c.l.b16 %v1783
        %v1850 = vunpack.c.l.b16 %v1784
        %v1851 = vunpack.c.l.b16 %v1785
        %v1852 = vunpack.c.l.b16 %v1786
        %v1853 = vunpack.c.l.b16 %v1787
        %v1854 = vunpack.c.l.b16 %v1788
        %v1855 = vunpack.c.l.b16 %v1789
        %v1856 = vunpack.c.l.b16 %v1790
        %v1857 = vunpack.c.l.b16 %v1791
        %v1858 = vunpack.c.l.b16 %v1792
        %v1859 = vunpack.c.l.b16 %v1793
        %v1860 = vunpack.c.l.b16 %v1794
        %v1861 = vunpack.c.l.b16 %v1795
        %v1862 = vunpack.c.l.b16 %v1796
        %v1863 = vunpack.c.l.b16 %v1797
        %v1864 = vunpack.c.l.b16 %v1798
        %v1865 = vunpack.c.l.b16 %v1799
        %v1866 = vunpack.c.l.b16 %v1800
        %v1867 = vpack.c.b16 %v1836, %v1835
        %v1868 = vpack.c.b16 %v1838, %v1837
        %v1869 = vpack.c.b16 %v1840, %v1839
        %v1870 = vpack.c.b16 %v1842, %v1841
        %v1871 = vpack.c.b16 %v1844, %v1843
        %v1872 = vpack.c.b16 %v1846, %v1845
        %v1873 = vpack.c.b16 %v1848, %v1847
        %v1874 = vpack.c.b16 %v1850, %v1849
        %v1875 = vpack.c.b16 %v1852, %v1851
        %v1876 = vpack.c.b16 %v1854, %v1853
        %v1877 = vpack.c.b16 %v1856, %v1855
        %v1878 = vpack.c.b16 %v1858, %v1857
        %v1879 = vpack.c.b16 %v1860, %v1859
        %v1880 = vpack.c.b16 %v1862, %v1861
        %v1881 = vpack.c.b16 %v1864, %v1863
        %v1882 = vpack.c.b16 %v1866, %v1865
        %1899 = vmatpush.bf16.msra.mxu0 %v1874
        %1900 = vmatpush.bf16.msra.mxu0 %v1873
        %1901 = vmatpush.bf16.msra.mxu0 %v1872
        %1902 = vmatpush.bf16.msra.mxu0 %v1871
        %1903 = vmatpush.bf16.msra.mxu0 %v1870
        %1904 = vmatpush.bf16.msra.mxu0 %v1869
        %1905 = vmatpush.bf16.msra.mxu0 %v1868
        %1906 = vmatpush.bf16.msra.mxu0 %v1867
        %1907 = vmatmul.bf16.gmra.mxu0 %v1767
        %v1908 = vpop.f32.mrf.mxu0
        %v1909 = vadd.f32 %v1802, %v1908
        %v1910 = vpop.f32.mrf.mxu0
        %v1911 = vadd.f32 %v1802, %v1910
        %1912 = vdwg.mxu0
        %1913 = vmatpush.bf16.msra.mxu0 %v1882
        %1914 = vmatpush.bf16.msra.mxu0 %v1881
        %1915 = vmatpush.bf16.msra.mxu0 %v1880
        %1916 = vmatpush.bf16.msra.mxu0 %v1879
        %1917 = vmatpush.bf16.msra.mxu0 %v1878
        %1918 = vmatpush.bf16.msra.mxu0 %v1877
        %1919 = vmatpush.bf16.msra.mxu0 %v1876
        %1920 = vmatpush.bf16.msra.mxu0 %v1875
        %1921 = vmatmul.bf16.gmra.mxu0 %v1768
        %v1922 = vpop.f32.mrf.mxu0
        %v1923 = vadd.f32 %v1909, %v1922
        %v1924 = vpop.f32.mrf.mxu0
        %v1925 = vadd.f32 %v1911, %v1924
        %1926 = vdwg.mxu0
        %v1927 = vsub.f32 0.0, %v1923
        %v1928 = vsub.f32 0.0, %v1925
        %v1929 = vmul.f32 %v1927, 1.442695
        %v1930 = vpow.pop %v1929
        %v1931 = vmul.f32 %v1928, 1.442695
        %v1932 = vpow.pop %v1931
        %v1933 = vadd.f32 %v1930, 1.0
        %v1934 = vadd.f32 %v1932, 1.0
        %v1935 = vrcp.pop %v1933
        %v1936 = vrcp.pop %v1934
        %v1937 = vadd.f32 %v1935, 1.0
        %v1938 = vadd.f32 %v1936, 1.0
        %v1939 = vmul.f32 %v1503, %v1937
        %v1940 = vmul.f32 %v1505, %v1938
        %v1941 = vpack.c.bf16 %v1940, %v1939
        %v1942 = vld [vmem:[#allocation13] sm:$0xf]
        %v1943 = vld [vmem:[#allocation13 + $0x4] sm:$0xf]
        %v1944 = vld [vmem:[#allocation13 + $0x8] sm:$0xf]
        %v1945 = vld [vmem:[#allocation13 + $0xc] sm:$0xf]
        %v1946 = vld [vmem:[#allocation13 + $0x10] sm:$0xf]
        %v1947 = vld [vmem:[#allocation13 + $0x14] sm:$0xf]
        %v1948 = vld [vmem:[#allocation13 + $0x18] sm:$0xf]
        %v1949 = vld [vmem:[#allocation13 + $0x1c] sm:$0xf]
        %v1950 = vld [vmem:[#allocation13 + $0x20] sm:$0xf]
        %v1951 = vld [vmem:[#allocation13 + $0x24] sm:$0xf]
        %v1952 = vld [vmem:[#allocation13 + $0x28] sm:$0xf]
        %v1953 = vld [vmem:[#allocation13 + $0x2c] sm:$0xf]
        %v1954 = vld [vmem:[#allocation13 + $0x30] sm:$0xf]
        %v1955 = vld [vmem:[#allocation13 + $0x34] sm:$0xf]
        %v1956 = vld [vmem:[#allocation13 + $0x38] sm:$0xf]
        %v1957 = vld [vmem:[#allocation13 + $0x3c] sm:$0xf]
        %v1974 = vunpack.c.l.b16 %v1942
        %v1975 = vunpack.c.l.b16 %v1943
        %v1976 = vunpack.c.l.b16 %v1944
        %v1977 = vunpack.c.l.b16 %v1945
        %v1978 = vunpack.c.l.b16 %v1946
        %v1979 = vunpack.c.l.b16 %v1947
        %v1980 = vunpack.c.l.b16 %v1948
        %v1981 = vunpack.c.l.b16 %v1949
        %v1982 = vunpack.c.l.b16 %v1950
        %v1983 = vunpack.c.l.b16 %v1951
        %v1984 = vunpack.c.l.b16 %v1952
        %v1985 = vunpack.c.l.b16 %v1953
        %v1986 = vunpack.c.l.b16 %v1954
        %v1987 = vunpack.c.l.b16 %v1955
        %v1988 = vunpack.c.l.b16 %v1956
        %v1989 = vunpack.c.l.b16 %v1957
        %v1990 = vpack.c.b16 %v1975, %v1974
        %v1991 = vpack.c.b16 %v1977, %v1976
        %v1992 = vpack.c.b16 %v1979, %v1978
        %v1993 = vpack.c.b16 %v1981, %v1980
        %v1994 = vpack.c.b16 %v1983, %v1982
        %v1995 = vpack.c.b16 %v1985, %v1984
        %v1996 = vpack.c.b16 %v1987, %v1986
        %v1997 = vpack.c.b16 %v1989, %v1988
        %2006 = vmatpush.bf16.msra.mxu0 %v1997
        %2007 = vmatpush.bf16.msra.mxu0 %v1996
        %2008 = vmatpush.bf16.msra.mxu0 %v1995
        %2009 = vmatpush.bf16.msra.mxu0 %v1994
        %2010 = vmatpush.bf16.msra.mxu0 %v1993
        %2011 = vmatpush.bf16.msra.mxu0 %v1992
        %2012 = vmatpush.bf16.msra.mxu0 %v1991
        %2013 = vmatpush.bf16.msra.mxu0 %v1990
        %2014 = vmatmul.bf16.gmra.mxu0 %v1941
        %v2015 = vpop.f32.mrf.mxu0
        %v2016 = vadd.f32 0.0, %v2015
        %v2017 = vpop.f32.mrf.mxu0
        %v2018 = vadd.f32 0.0, %v2017
        %2019 = vdwg.mxu0
        %v2020 = vmul.f32 %v993, 3.0
        %v2021 = vmul.f32 %v995, 3.0
        %v2022 = vadd.f32 %v2020, %v1503
        %v2023 = vadd.f32 %v2021, %v1505
        %v2024 = vadd.f32 %v2022, %v2016
        %v2025 = vadd.f32 %v2023, %v2018
        %2026 = vst [vmem:[%s447] sm:$0xff] %v2024
        %2027 = vst [vmem:[%s447 + $0x8] sm:$0xff] %v2025
        %s2028 = sand.u32 %s216, 1
        %s2029 = scalar_lea.sflag [#allocation4], %s2028
        %s2030 = sand.u32 %s216, 1
        %s2031 = smul.addr %s2030, 16
        %s2032 = scalar_lea.vmem [#allocation14], %s2031
        // Predicated region
        $region81: #{tpu_custom_call.1} parent=51 // pred_check
          %p2033 = pneg %p226
        $region82: #{tpu_custom_call.1} parent=51 // pred_check_branch
          %2035 = sbr.rel (%p2033) target = $region84
        $region83: #{tpu_custom_call.1} parent=51 // pred_region
          %s2036 = smul.u32 2, %s30
          %2038 = vsyncadd %s2029, 0
          %s2039 = smul.addr %s2036, 8
          %s2040 = scalar_lea.hbm %s8, %s2039
          %s2041 = sshll.u32 %s2032, 4
          %s2042 = int_to_ptr.vmem [resolvable:$true] %s2041
          %s2043 = sshll.u32 %s2040, 4
          %s2044 = int_to_ptr.hbm [resolvable:$true] %s2043
          %2049 = dma.vmem_to_hbm [thread:$0]  %s2042, 256, %s2044, %s2029, 128, 128, 8
        $region84: #{tpu_custom_call.1} parent=51 // pred_fallthru
          _
      $region52: #{tpu_custom_call.1} parent=5 // pred_fallthru
        _
      %p2050 = scmp.le.s32.totalorder 2, %s25
      // Predicated region
      $region85: #{tpu_custom_call.1} parent=5 // pred_check
        %p2051 = pneg %p2050
      $region86: #{tpu_custom_call.1} parent=5 // pred_check_branch
        %2053 = sbr.rel (%p2051) target = $region88
      $region87: #{tpu_custom_call.1} parent=5 // pred_region
        %s2054 = ssub.s32 %s25, 2
        // Predicated region
        $region89: #{tpu_custom_call.1} parent=87 // pred_check
          %p2055 = pneg %p232
        $region90: #{tpu_custom_call.1} parent=87 // pred_check_branch
          %2057 = sbr.rel (%p2055) target = $region92
        $region91: #{tpu_custom_call.1} parent=87 // pred_region
          %s2058 = sand.u32 %s217, 1
          %s2059 = scalar_lea.sflag [#allocation4], %s2058
          %s2060 = sand.u32 %s217, 1
          %s2061 = smul.addr %s2060, 16
          %s2062 = scalar_lea.vmem [#allocation14], %s2061
          %2064 = dma.done %s2059, 256
        $region92: #{tpu_custom_call.1} parent=87 // pred_fallthru
          _
      $region88: #{tpu_custom_call.1} parent=5 // pred_fallthru
        _
    $region6: #{tpu_custom_call.1} parent=1 // loop_footer
      %s29 = sadd.s32 1, %s25
    $region7: #{tpu_custom_call.1} parent=1 // loop_footer_branch
      %24 = sbr.rel target = $region3
    $region8: #{tpu_custom_call.1} parent=1 // loop_exit
      _
    %2065 = vsyncpa [#allocation3], 1
    %s2066 = scalar_lea.sflag [#allocation3], 1
    %2067 = vsyncpa %s2066, 1
    %2068 = vsyncpa [#allocation6], 1
    %s2069 = scalar_lea.sflag [#allocation6], 1
    %2070 = vsyncpa %s2069, 1
    %2071 = vsyncpa [#allocation9], 1
    %2072 = vsyncpa [#allocation12], 1
    %2073 = vsyncpa [#allocation4], 1
    %s2074 = scalar_lea.sflag [#allocation4], 1
    %2075 = vsyncpa %s2074, 1

</llo_original>
